<compile_context>
chip_gen: v7x
topology: tpu7x:2x2x1
jax: 0.10.0
libtpu: 0.0.40
codegen_flags: <defaults>
</compile_context>

<pallas_src>
import functools

import jax
import jax.numpy as jnp
from jax.experimental import pallas as pl
from jax.experimental.pallas import tpu as pltpu

LANE = 128
SUBLANE_BF16 = 16  # minimum sublane tile for a bf16 block


def _round_up(x, m):
    return (x + m - 1) // m * m


def _vmem_budget_bytes():
    """Per-generation VMEM budget: ~75% of physical capacity, capped at 100 MiB.
    -> ~96 MiB on v5e/v6e (128 MiB physical), ~48 MiB on v7x (64 MiB physical)."""
    phys = 64 << 20  # conservative default (v7x-sized) if the query is unavailable
    try:
        info = pltpu.get_tpu_info()
        phys = int(getattr(info, "vmem_capacity_bytes", phys))
    except Exception:
        pass
    return int(min(phys * 3 // 4, 100 << 20))


def svae_kernel(x_ref, eps_ref,
                w_enc_ref, b_enc_ref,
                w_ml_ref, b_ml_ref,
                w_dec_ref, b_dec_ref,
                recon_ref, ml_ref):
    bf16 = jnp.bfloat16
    lp = eps_ref.shape[-1]                      # padded latent width

    x = x_ref[...]                              # [TB, Dp] bf16 (stored bf16 in HBM)

    # encoder: Linear + ReLU  (bf16 MXU operands, f32 accumulate + f32 epilogue)
    h = jnp.dot(x, w_enc_ref[...], preferred_element_type=jnp.float32)
    h = jnp.maximum(h + b_enc_ref[...], 0.0)    # [TB, Hp] f32

    # fused mean | log_var projection: one matmul over [Hp, 2*Lp], one wide store
    ml = jnp.dot(h.astype(bf16), w_ml_ref[...],
                 preferred_element_type=jnp.float32) + b_ml_ref[...]
    mean = ml[:, :lp]                           # lane-aligned slices
    log_var = ml[:, lp:]

    # reparameterization (all f32 on VPU/EUP): z = mean + exp(0.5*log_var) * eps
    z = mean + jnp.exp(0.5 * log_var) * eps_ref[...]

    # decoder: Linear + Sigmoid
    recon = jnp.dot(z.astype(bf16), w_dec_ref[...],
                    preferred_element_type=jnp.float32) + b_dec_ref[...]
    recon_ref[...] = jax.nn.sigmoid(recon)      # [TB, Dp] f32
    ml_ref[...] = ml                            # [TB, 2*Lp] f32 (split in wrapper)


def _pick_tb(batch, dp, hp, lp, budget):
    """Batch-tile choice: as large as possible (fewer grid steps, each costing
    ~0.35 us of overhead) while (a) the grid keeps >= 2 steps so the pipeline /
    both v7x TensorCores have work, and (b) double-buffered streams + resident
    weights fit the per-generation VMEM budget."""
    if batch >= 1024:
        tb = 512
    elif batch > SUBLANE_BF16:
        tb = _round_up(-(-batch // 2), SUBLANE_BF16)   # ensures >= 2 grid steps
    else:
        tb = _round_up(max(batch, 1), SUBLANE_BF16)

    w_bytes = (dp * hp + hp * 2 * lp + lp * dp) * 2 + (hp + 2 * lp + dp) * 4

    def working_set(t):
        streams = 2 * (t * dp * 2 + t * lp * 4)        # x(bf16) + eps(f32), double-buffered
        outs = 2 * (t * dp * 4 + t * 2 * lp * 4)       # recon + mean|logvar, double-buffered
        live = t * (hp + 2 * lp + dp) * 4              # rough in-flight f32 intermediates
        return w_bytes + streams + outs + live

    while tb > SUBLANE_BF16 and working_set(tb) > budget:
        tb = max(SUBLANE_BF16, _round_up(tb // 2, SUBLANE_BF16))
    return tb


def svae_forward(x, eps, params, *, tb=None):
    """Fused SVAE forward. x: [B, D_in] f32, eps: [B, L] f32.
    Returns (reconstruction [B, D_in], mean [B, L], log_var [B, L])."""
    B, D_in = x.shape
    L = eps.shape[1]
    H = params["w_enc"].shape[1]

    # lane-dense padded dims (for real models with H/L/D >= 256, padding to 256
    # better fills the 256x256 MXU on v6e/v7x; irrelevant at these toy dims)
    Dp = _round_up(D_in, LANE)
    Hp = _round_up(H, LANE)
    Lp = _round_up(L, LANE)

    budget = _vmem_budget_bytes()
    if tb is None:
        tb = _pick_tb(B, Dp, Hp, Lp, budget)
    else:
        tb = _round_up(tb, SUBLANE_BF16)
    Bp = _round_up(B, tb)

    f32, bf16 = jnp.float32, jnp.bfloat16

    def pad2(a, r, c):
        a = a.astype(f32)
        return jnp.pad(a, ((0, r - a.shape[0]), (0, c - a.shape[1])))

    # activations: x streams bf16 (dominant HBM read halved; operand was already
    # bf16 so no extra precision change); eps stays f32 for an exact f32 epilogue.
    xp = pad2(x, Bp, Dp).astype(bf16)
    epsp = pad2(eps, Bp, Lp)

    # weights: padded, bf16, stored [in, out]; biases stay f32
    w_enc = pad2(params["w_enc"], Dp, Hp).astype(bf16)
    b_enc = pad2(params["b_enc"], 1, Hp)
    w_ml = jnp.concatenate([pad2(params["w_mu"], Hp, Lp),
                            pad2(params["w_lv"], Hp, Lp)], axis=1).astype(bf16)
    b_ml = jnp.concatenate([pad2(params["b_mu"], 1, Lp),
                            pad2(params["b_lv"], 1, Lp)], axis=1)
    w_dec = pad2(params["w_dec"], Lp, Dp).astype(bf16)
    b_dec = pad2(params["b_dec"], 1, Dp)

    grid = (Bp // tb,)

    def batch_spec(feat):
        return pl.BlockSpec((tb, feat), lambda i: (i, 0))

    out_shapes = (
        jax.ShapeDtypeStruct((Bp, Dp), f32),       # reconstruction (padded)
        jax.ShapeDtypeStruct((Bp, 2 * Lp), f32),   # mean|log_var fused (padded)
    )

    def run(single_buffer_weights):
        def const_spec(shape):
            # constant index_map -> resident in VMEM, not re-DMA'd per batch tile;
            # Buffered(1) drops the pointless second buffer for these blocks.
            nd = len(shape)
            idx = lambda i, _nd=nd: (0,) * _nd
            if single_buffer_weights:
                return pl.BlockSpec(shape, idx, pipeline_mode=pl.Buffered(1))
            return pl.BlockSpec(shape, idx)

        grid_spec = pltpu.PrefetchScalarGridSpec(
            num_scalar_prefetch=0,
            grid=grid,
            in_specs=[
                batch_spec(Dp),            # x (bf16)
                batch_spec(Lp),            # eps (f32)
                const_spec((Dp, Hp)),      # w_enc
                const_spec((1, Hp)),       # b_enc
                const_spec((Hp, 2 * Lp)),  # w_mu|w_lv fused
                const_spec((1, 2 * Lp)),   # b_mu|b_lv fused
                const_spec((Lp, Dp)),      # w_dec
                const_spec((1, Dp)),       # b_dec
            ],
            out_specs=[batch_spec(Dp), batch_spec(2 * Lp)],
            scratch_shapes=[],
        )
        return pl.pallas_call(
            svae_kernel,
            out_shape=out_shapes,
            grid_spec=grid_spec,
            compiler_params=pltpu.CompilerParams(
                # megacore / v7x dual-TC shards the batch-tile axis
                dimension_semantics=("parallel",),
                vmem_limit_bytes=int(budget),
            ),
        )(xp, epsp, w_enc, b_enc, w_ml, b_ml, w_dec, b_dec)

    try:
        recon_p, ml_p = run(single_buffer_weights=True)
    except Exception:
        # Graceful fallback if this JAX version rejects per-BlockSpec buffer
        # counts on the automatic pipeline: default double-buffered weights.
        recon_p, ml_p = run(single_buffer_weights=False)

    # strip padding / split the fused mean|log_var outside the kernel
    return recon_p[:B, :D_in], ml_p[:B, :L], ml_p[:B, Lp:Lp + L]


def init_params(key, d_in, hidden, latent):
    """Deterministic PyTorch-Linear-style init (uniform +/- 1/sqrt(fan_in)),
    with weights stored as [in, out]."""
    ks = jax.random.split(key, 8)

    def lin(kw, kb, fan_in, fan_out):
        bound = 1.0 / jnp.sqrt(fan_in)
        w = jax.random.uniform(kw, (fan_in, fan_out), jnp.float32, -bound, bound)
        b = jax.random.uniform(kb, (1, fan_out), jnp.float32, -bound, bound)
        return w, b

    w_enc, b_enc = lin(ks[0], ks[1], d_in, hidden)
    w_mu, b_mu = lin(ks[2], ks[3], hidden, latent)
    w_lv, b_lv = lin(ks[4], ks[5], hidden, latent)
    w_dec, b_dec = lin(ks[6], ks[7], latent, d_in)
    return dict(w_enc=w_enc, b_enc=b_enc, w_mu=w_mu, b_mu=b_mu,
                w_lv=w_lv, b_lv=b_lv, w_dec=w_dec, b_dec=b_dec)


def svae_reference(x, eps, p):
    """Pure-JAX reference with the same bf16-operand / f32-accumulate matmul
    precision as the kernel (elementwise math in f32)."""
    bf16 = jnp.bfloat16
    dot = functools.partial(jnp.dot, preferred_element_type=jnp.float32)
    h = jnp.maximum(dot(x.astype(bf16), p["w_enc"].astype(bf16)) + p["b_enc"], 0.0)
    mean = dot(h.astype(bf16), p["w_mu"].astype(bf16)) + p["b_mu"]
    log_var = dot(h.astype(bf16), p["w_lv"].astype(bf16)) + p["b_lv"]
    z = mean + jnp.exp(0.5 * log_var) * eps
    recon = jax.nn.sigmoid(dot(z.astype(bf16), p["w_dec"].astype(bf16)) + p["b_dec"])
    return recon, mean, log_var


if __name__ == "__main__":
    B, D_IN, HIDDEN, LATENT = 32, 64, 32, 16

    key = jax.random.PRNGKey(0)
    k_x, k_eps, k_params = jax.random.split(key, 3)

    x = jax.random.normal(k_x, (B, D_IN), jnp.float32)
    eps = jax.random.normal(k_eps, (B, LATENT), jnp.float32)  # torch.randn_like stand-in
    params = init_params(k_params, D_IN, HIDDEN, LATENT)

    recon, mean, log_var = svae_forward(x, eps, params)
    jax.block_until_ready((recon, mean, log_var))

    r_ref, m_ref, lv_ref = svae_reference(x, eps, params)
    assert recon.shape == (B, D_IN) and mean.shape == (B, LATENT) and log_var.shape == (B, LATENT)
    assert jnp.allclose(recon, r_ref, atol=1e-4, rtol=1e-4)
    assert jnp.allclose(mean, m_ref, atol=1e-4, rtol=1e-4)
    assert jnp.allclose(log_var, lv_ref, atol=1e-4, rtol=1e-4)

    print("KERNEL_OK")
</pallas_src>

<mosaic_0001>
module attributes {stable_mosaic.version = 11 : i64} {
  func.func @svae_kernel(%arg0: i32, %arg1: memref<16x128xbf16, #tpu.memory_space<vmem>>, %arg2: memref<16x128xf32, #tpu.memory_space<vmem>>, %arg3: memref<128x128xbf16, #tpu.memory_space<vmem>>, %arg4: memref<1x128xf32, #tpu.memory_space<vmem>>, %arg5: memref<128x256xbf16, #tpu.memory_space<vmem>>, %arg6: memref<1x256xf32, #tpu.memory_space<vmem>>, %arg7: memref<128x128xbf16, #tpu.memory_space<vmem>>, %arg8: memref<1x128xf32, #tpu.memory_space<vmem>>, %arg9: memref<16x128xf32, #tpu.memory_space<vmem>>, %arg10: memref<16x256xf32, #tpu.memory_space<vmem>>) attributes {dimension_semantics = [#tpu.dimension_semantics<parallel>], iteration_bounds = array<i64: 2>, scalar_prefetch = 0 : i64, scratch_operands = 0 : i64, tpu.core_type = #tpu.core_type<tc>, window_params = [{transform_indices = @transform_0, window_bounds = array<i64: 16, 128>}, {transform_indices = @transform_1, window_bounds = array<i64: 16, 128>}, {pipeline_mode = #tpu.pipeline_mode<synchronous>, transform_indices = @transform_2, window_bounds = array<i64: 128, 128>}, {pipeline_mode = #tpu.pipeline_mode<synchronous>, transform_indices = @transform_3, window_bounds = array<i64: 1, 128>}, {pipeline_mode = #tpu.pipeline_mode<synchronous>, transform_indices = @transform_4, window_bounds = array<i64: 128, 256>}, {pipeline_mode = #tpu.pipeline_mode<synchronous>, transform_indices = @transform_5, window_bounds = array<i64: 1, 256>}, {pipeline_mode = #tpu.pipeline_mode<synchronous>, transform_indices = @transform_6, window_bounds = array<i64: 128, 128>}, {pipeline_mode = #tpu.pipeline_mode<synchronous>, transform_indices = @transform_7, window_bounds = array<i64: 1, 128>}, {transform_indices = @transform_8, window_bounds = array<i64: 16, 128>}, {transform_indices = @transform_9, window_bounds = array<i64: 16, 256>}]} {
    %c0 = arith.constant 0 : index
    %c0_0 = arith.constant 0 : index
    %0 = vector.load %arg1[%c0, %c0_0] : memref<16x128xbf16, #tpu.memory_space<vmem>>, vector<16x128xbf16>
    %c0_1 = arith.constant 0 : index
    %c0_2 = arith.constant 0 : index
    %1 = vector.load %arg3[%c0_1, %c0_2] : memref<128x128xbf16, #tpu.memory_space<vmem>>, vector<128x128xbf16>
    %cst = arith.constant dense<0.000000e+00> : vector<16x128xf32>
    %2 = tpu.matmul %0, %1, %cst {dimension_numbers = #tpu.dot_dimension_numbers<[1], [0], [0], [1], [0, 0, 1, 1], [], []>} : vector<16x128xbf16>, vector<128x128xbf16>, vector<16x128xf32> -> vector<16x128xf32>
    %c0_3 = arith.constant 0 : index
    %c0_4 = arith.constant 0 : index
    %3 = vector.load %arg4[%c0_3, %c0_4] : memref<1x128xf32, #tpu.memory_space<vmem>>, vector<1x128xf32>
    %4 = vector.broadcast %3 : vector<1x128xf32> to vector<16x128xf32>
    %5 = arith.addf %2, %4 : vector<16x128xf32>
    %cst_5 = arith.constant 0.000000e+00 : f32
    %6 = vector.broadcast %cst_5 : f32 to vector<16x128xf32>
    %7 = arith.maximumf %5, %6 : vector<16x128xf32>
    %8 = arith.truncf %7 : vector<16x128xf32> to vector<16x128xbf16>
    %c0_6 = arith.constant 0 : index
    %c0_7 = arith.constant 0 : index
    %9 = vector.load %arg5[%c0_6, %c0_7] : memref<128x256xbf16, #tpu.memory_space<vmem>>, vector<128x256xbf16>
    %cst_8 = arith.constant dense<0.000000e+00> : vector<16x256xf32>
    %10 = tpu.matmul %8, %9, %cst_8 {dimension_numbers = #tpu.dot_dimension_numbers<[1], [0], [0], [1], [0, 0, 1, 1], [], []>} : vector<16x128xbf16>, vector<128x256xbf16>, vector<16x256xf32> -> vector<16x256xf32>
    %c0_9 = arith.constant 0 : index
    %c0_10 = arith.constant 0 : index
    %11 = vector.load %arg6[%c0_9, %c0_10] : memref<1x256xf32, #tpu.memory_space<vmem>>, vector<1x256xf32>
    %12 = vector.broadcast %11 : vector<1x256xf32> to vector<16x256xf32>
    %13 = arith.addf %10, %12 : vector<16x256xf32>
    %14 = vector.extract_strided_slice %13 {offsets = [0, 0], sizes = [16, 128], strides = [1, 1]} : vector<16x256xf32> to vector<16x128xf32>
    %15 = vector.extract_strided_slice %13 {offsets = [0, 128], sizes = [16, 128], strides = [1, 1]} : vector<16x256xf32> to vector<16x128xf32>
    %cst_11 = arith.constant 5.000000e-01 : f32
    %16 = vector.broadcast %cst_11 : f32 to vector<16x128xf32>
    %17 = arith.mulf %16, %15 : vector<16x128xf32>
    %18 = math.exp %17 : vector<16x128xf32>
    %c0_12 = arith.constant 0 : index
    %c0_13 = arith.constant 0 : index
    %19 = vector.load %arg2[%c0_12, %c0_13] : memref<16x128xf32, #tpu.memory_space<vmem>>, vector<16x128xf32>
    %20 = arith.mulf %18, %19 : vector<16x128xf32>
    %21 = arith.addf %14, %20 : vector<16x128xf32>
    %22 = arith.truncf %21 : vector<16x128xf32> to vector<16x128xbf16>
    %c0_14 = arith.constant 0 : index
    %c0_15 = arith.constant 0 : index
    %23 = vector.load %arg7[%c0_14, %c0_15] : memref<128x128xbf16, #tpu.memory_space<vmem>>, vector<128x128xbf16>
    %cst_16 = arith.constant dense<0.000000e+00> : vector<16x128xf32>
    %24 = tpu.matmul %22, %23, %cst_16 {dimension_numbers = #tpu.dot_dimension_numbers<[1], [0], [0], [1], [0, 0, 1, 1], [], []>} : vector<16x128xbf16>, vector<128x128xbf16>, vector<16x128xf32> -> vector<16x128xf32>
    %c0_17 = arith.constant 0 : index
    %c0_18 = arith.constant 0 : index
    %25 = vector.load %arg8[%c0_17, %c0_18] : memref<1x128xf32, #tpu.memory_space<vmem>>, vector<1x128xf32>
    %26 = vector.broadcast %25 : vector<1x128xf32> to vector<16x128xf32>
    %27 = arith.addf %24, %26 : vector<16x128xf32>
    %28 = arith.negf %27 : vector<16x128xf32>
    %29 = math.exp %28 : vector<16x128xf32>
    %cst_19 = arith.constant 1.000000e+00 : f32
    %30 = vector.broadcast %cst_19 : f32 to vector<16x128xf32>
    %31 = arith.addf %30, %29 : vector<16x128xf32>
    %32 = arith.divf %30, %31 : vector<16x128xf32>
    %c0_20 = arith.constant 0 : index
    %c0_21 = arith.constant 0 : index
    %33 = vector.load %arg9[%c0_20, %c0_21] : memref<16x128xf32, #tpu.memory_space<vmem>>, vector<16x128xf32>
    tpu.vector_store %arg9[%c0_20, %c0_21], %32 {strides = array<i32>} : memref<16x128xf32, #tpu.memory_space<vmem>>, vector<16x128xf32>,
    %c0_22 = arith.constant 0 : index
    %c0_23 = arith.constant 0 : index
    %34 = vector.load %arg10[%c0_22, %c0_23] : memref<16x256xf32, #tpu.memory_space<vmem>>, vector<16x256xf32>
    tpu.vector_store %arg10[%c0_22, %c0_23], %13 {strides = array<i32>} : memref<16x256xf32, #tpu.memory_space<vmem>>, vector<16x256xf32>,
    return
  }
  func.func @transform_0(%arg0: i32) -> (i32, i32) {
    %c0_i32 = arith.constant 0 : i32
    %c0_i32_0 = arith.constant 0 : i32
    return %arg0, %c0_i32 : i32, i32
  }
  func.func @transform_1(%arg0: i32) -> (i32, i32) {
    %c0_i32 = arith.constant 0 : i32
    %c0_i32_0 = arith.constant 0 : i32
    return %arg0, %c0_i32 : i32, i32
  }
  func.func @transform_2(%arg0: i32) -> (i32, i32) {
    %c0_i32 = arith.constant 0 : i32
    %c0_i32_0 = arith.constant 0 : i32
    %c0_i32_1 = arith.constant 0 : i32
    return %c0_i32, %c0_i32_0 : i32, i32
  }
  func.func @transform_3(%arg0: i32) -> (i32, i32) {
    %c0_i32 = arith.constant 0 : i32
    %c0_i32_0 = arith.constant 0 : i32
    %c0_i32_1 = arith.constant 0 : i32
    return %c0_i32, %c0_i32_0 : i32, i32
  }
  func.func @transform_4(%arg0: i32) -> (i32, i32) {
    %c0_i32 = arith.constant 0 : i32
    %c0_i32_0 = arith.constant 0 : i32
    %c0_i32_1 = arith.constant 0 : i32
    return %c0_i32, %c0_i32_0 : i32, i32
  }
  func.func @transform_5(%arg0: i32) -> (i32, i32) {
    %c0_i32 = arith.constant 0 : i32
    %c0_i32_0 = arith.constant 0 : i32
    %c0_i32_1 = arith.constant 0 : i32
    return %c0_i32, %c0_i32_0 : i32, i32
  }
  func.func @transform_6(%arg0: i32) -> (i32, i32) {
    %c0_i32 = arith.constant 0 : i32
    %c0_i32_0 = arith.constant 0 : i32
    %c0_i32_1 = arith.constant 0 : i32
    return %c0_i32, %c0_i32_0 : i32, i32
  }
  func.func @transform_7(%arg0: i32) -> (i32, i32) {
    %c0_i32 = arith.constant 0 : i32
    %c0_i32_0 = arith.constant 0 : i32
    %c0_i32_1 = arith.constant 0 : i32
    return %c0_i32, %c0_i32_0 : i32, i32
  }
  func.func @transform_8(%arg0: i32) -> (i32, i32) {
    %c0_i32 = arith.constant 0 : i32
    %c0_i32_0 = arith.constant 0 : i32
    return %arg0, %c0_i32 : i32, i32
  }
  func.func @transform_9(%arg0: i32) -> (i32, i32) {
    %c0_i32 = arith.constant 0 : i32
    %c0_i32_0 = arith.constant 0 : i32
    return %arg0, %c0_i32 : i32, i32
  }
}

module attributes {stable_mosaic.version = 11 : i64} {
  func.func @svae_kernel(%arg0: i32, %arg1: memref<16x128xbf16, #tpu.memory_space<vmem>>, %arg2: memref<16x128xf32, #tpu.memory_space<vmem>>, %arg3: memref<128x128xbf16, #tpu.memory_space<vmem>>, %arg4: memref<1x128xf32, #tpu.memory_space<vmem>>, %arg5: memref<128x256xbf16, #tpu.memory_space<vmem>>, %arg6: memref<1x256xf32, #tpu.memory_space<vmem>>, %arg7: memref<128x128xbf16, #tpu.memory_space<vmem>>, %arg8: memref<1x128xf32, #tpu.memory_space<vmem>>, %arg9: memref<16x128xf32, #tpu.memory_space<vmem>>, %arg10: memref<16x256xf32, #tpu.memory_space<vmem>>) attributes {dimension_semantics = [#tpu.dimension_semantics<parallel>], iteration_bounds = array<i64: 2>, scalar_prefetch = 0 : i64, scratch_operands = 0 : i64, tpu.core_type = #tpu.core_type<tc>, window_params = [{transform_indices = @transform_0, window_bounds = array<i64: 16, 128>}, {transform_indices = @transform_1, window_bounds = array<i64: 16, 128>}, {pipeline_mode = #tpu.pipeline_mode<synchronous>, transform_indices = @transform_2, window_bounds = array<i64: 128, 128>}, {pipeline_mode = #tpu.pipeline_mode<synchronous>, transform_indices = @transform_3, window_bounds = array<i64: 1, 128>}, {pipeline_mode = #tpu.pipeline_mode<synchronous>, transform_indices = @transform_4, window_bounds = array<i64: 128, 256>}, {pipeline_mode = #tpu.pipeline_mode<synchronous>, transform_indices = @transform_5, window_bounds = array<i64: 1, 256>}, {pipeline_mode = #tpu.pipeline_mode<synchronous>, transform_indices = @transform_6, window_bounds = array<i64: 128, 128>}, {pipeline_mode = #tpu.pipeline_mode<synchronous>, transform_indices = @transform_7, window_bounds = array<i64: 1, 128>}, {transform_indices = @transform_8, window_bounds = array<i64: 16, 128>}, {transform_indices = @transform_9, window_bounds = array<i64: 16, 256>}]} {
    %c0 = arith.constant 0 : index
    %c0_0 = arith.constant 0 : index
    %0 = vector.load %arg1[%c0, %c0_0] : memref<16x128xbf16, #tpu.memory_space<vmem>>, vector<16x128xbf16>
    %c0_1 = arith.constant 0 : index
    %c0_2 = arith.constant 0 : index
    %1 = vector.load %arg3[%c0_1, %c0_2] : memref<128x128xbf16, #tpu.memory_space<vmem>>, vector<128x128xbf16>
    %cst = arith.constant dense<0.000000e+00> : vector<16x128xf32>
    %2 = tpu.matmul %0, %1, %cst {dimension_numbers = #tpu.dot_dimension_numbers<[1], [0], [0], [1], [0, 0, 1, 1], [], []>} : vector<16x128xbf16>, vector<128x128xbf16>, vector<16x128xf32> -> vector<16x128xf32>
    %c0_3 = arith.constant 0 : index
    %c0_4 = arith.constant 0 : index
    %3 = vector.load %arg4[%c0_3, %c0_4] : memref<1x128xf32, #tpu.memory_space<vmem>>, vector<1x128xf32>
    %4 = vector.broadcast %3 : vector<1x128xf32> to vector<16x128xf32>
    %5 = arith.addf %2, %4 : vector<16x128xf32>
    %cst_5 = arith.constant 0.000000e+00 : f32
    %6 = vector.broadcast %cst_5 : f32 to vector<16x128xf32>
    %7 = arith.maximumf %5, %6 : vector<16x128xf32>
    %8 = arith.truncf %7 : vector<16x128xf32> to vector<16x128xbf16>
    %c0_6 = arith.constant 0 : index
    %c0_7 = arith.constant 0 : index
    %9 = vector.load %arg5[%c0_6, %c0_7] : memref<128x256xbf16, #tpu.memory_space<vmem>>, vector<128x256xbf16>
    %cst_8 = arith.constant dense<0.000000e+00> : vector<16x256xf32>
    %10 = tpu.matmul %8, %9, %cst_8 {dimension_numbers = #tpu.dot_dimension_numbers<[1], [0], [0], [1], [0, 0, 1, 1], [], []>} : vector<16x128xbf16>, vector<128x256xbf16>, vector<16x256xf32> -> vector<16x256xf32>
    %c0_9 = arith.constant 0 : index
    %c0_10 = arith.constant 0 : index
    %11 = vector.load %arg6[%c0_9, %c0_10] : memref<1x256xf32, #tpu.memory_space<vmem>>, vector<1x256xf32>
    %12 = vector.broadcast %11 : vector<1x256xf32> to vector<16x256xf32>
    %13 = arith.addf %10, %12 : vector<16x256xf32>
    %14 = vector.extract_strided_slice %13 {offsets = [0, 0], sizes = [16, 128], strides = [1, 1]} : vector<16x256xf32> to vector<16x128xf32>
    %15 = vector.extract_strided_slice %13 {offsets = [0, 128], sizes = [16, 128], strides = [1, 1]} : vector<16x256xf32> to vector<16x128xf32>
    %cst_11 = arith.constant 5.000000e-01 : f32
    %16 = vector.broadcast %cst_11 : f32 to vector<16x128xf32>
    %17 = arith.mulf %16, %15 : vector<16x128xf32>
    %18 = math.exp %17 : vector<16x128xf32>
    %c0_12 = arith.constant 0 : index
    %c0_13 = arith.constant 0 : index
    %19 = vector.load %arg2[%c0_12, %c0_13] : memref<16x128xf32, #tpu.memory_space<vmem>>, vector<16x128xf32>
    %20 = arith.mulf %18, %19 : vector<16x128xf32>
    %21 = arith.addf %14, %20 : vector<16x128xf32>
    %22 = arith.truncf %21 : vector<16x128xf32> to vector<16x128xbf16>
    %c0_14 = arith.constant 0 : index
    %c0_15 = arith.constant 0 : index
    %23 = vector.load %arg7[%c0_14, %c0_15] : memref<128x128xbf16, #tpu.memory_space<vmem>>, vector<128x128xbf16>
    %cst_16 = arith.constant dense<0.000000e+00> : vector<16x128xf32>
    %24 = tpu.matmul %22, %23, %cst_16 {dimension_numbers = #tpu.dot_dimension_numbers<[1], [0], [0], [1], [0, 0, 1, 1], [], []>} : vector<16x128xbf16>, vector<128x128xbf16>, vector<16x128xf32> -> vector<16x128xf32>
    %c0_17 = arith.constant 0 : index
    %c0_18 = arith.constant 0 : index
    %25 = vector.load %arg8[%c0_17, %c0_18] : memref<1x128xf32, #tpu.memory_space<vmem>>, vector<1x128xf32>
    %26 = vector.broadcast %25 : vector<1x128xf32> to vector<16x128xf32>
    %27 = arith.addf %24, %26 : vector<16x128xf32>
    %28 = arith.negf %27 : vector<16x128xf32>
    %29 = math.exp %28 : vector<16x128xf32>
    %cst_19 = arith.constant 1.000000e+00 : f32
    %30 = vector.broadcast %cst_19 : f32 to vector<16x128xf32>
    %31 = arith.addf %30, %29 : vector<16x128xf32>
    %32 = arith.divf %30, %31 : vector<16x128xf32>
    %c0_20 = arith.constant 0 : index
    %c0_21 = arith.constant 0 : index
    %33 = vector.load %arg9[%c0_20, %c0_21] : memref<16x128xf32, #tpu.memory_space<vmem>>, vector<16x128xf32>
    tpu.vector_store %arg9[%c0_20, %c0_21], %32 {strides = array<i32>} : memref<16x128xf32, #tpu.memory_space<vmem>>, vector<16x128xf32>,
    %c0_22 = arith.constant 0 : index
    %c0_23 = arith.constant 0 : index
    %34 = vector.load %arg10[%c0_22, %c0_23] : memref<16x256xf32, #tpu.memory_space<vmem>>, vector<16x256xf32>
    tpu.vector_store %arg10[%c0_22, %c0_23], %13 {strides = array<i32>} : memref<16x256xf32, #tpu.memory_space<vmem>>, vector<16x256xf32>,
    return
  }
  func.func @transform_0(%arg0: i32) -> (i32, i32) {
    %c0_i32 = arith.constant 0 : i32
    %c0_i32_0 = arith.constant 0 : i32
    return %arg0, %c0_i32 : i32, i32
  }
  func.func @transform_1(%arg0: i32) -> (i32, i32) {
    %c0_i32 = arith.constant 0 : i32
    %c0_i32_0 = arith.constant 0 : i32
    return %arg0, %c0_i32 : i32, i32
  }
  func.func @transform_2(%arg0: i32) -> (i32, i32) {
    %c0_i32 = arith.constant 0 : i32
    %c0_i32_0 = arith.constant 0 : i32
    %c0_i32_1 = arith.constant 0 : i32
    return %c0_i32, %c0_i32_0 : i32, i32
  }
  func.func @transform_3(%arg0: i32) -> (i32, i32) {
    %c0_i32 = arith.constant 0 : i32
    %c0_i32_0 = arith.constant 0 : i32
    %c0_i32_1 = arith.constant 0 : i32
    return %c0_i32, %c0_i32_0 : i32, i32
  }
  func.func @transform_4(%arg0: i32) -> (i32, i32) {
    %c0_i32 = arith.constant 0 : i32
    %c0_i32_0 = arith.constant 0 : i32
    %c0_i32_1 = arith.constant 0 : i32
    return %c0_i32, %c0_i32_0 : i32, i32
  }
  func.func @transform_5(%arg0: i32) -> (i32, i32) {
    %c0_i32 = arith.constant 0 : i32
    %c0_i32_0 = arith.constant 0 : i32
    %c0_i32_1 = arith.constant 0 : i32
    return %c0_i32, %c0_i32_0 : i32, i32
  }
  func.func @transform_6(%arg0: i32) -> (i32, i32) {
    %c0_i32 = arith.constant 0 : i32
    %c0_i32_0 = arith.constant 0 : i32
    %c0_i32_1 = arith.constant 0 : i32
    return %c0_i32, %c0_i32_0 : i32, i32
  }
  func.func @transform_7(%arg0: i32) -> (i32, i32) {
    %c0_i32 = arith.constant 0 : i32
    %c0_i32_0 = arith.constant 0 : i32
    %c0_i32_1 = arith.constant 0 : i32
    return %c0_i32, %c0_i32_0 : i32, i32
  }
  func.func @transform_8(%arg0: i32) -> (i32, i32) {
    %c0_i32 = arith.constant 0 : i32
    %c0_i32_0 = arith.constant 0 : i32
    return %arg0, %c0_i32 : i32, i32
  }
  func.func @transform_9(%arg0: i32) -> (i32, i32) {
    %c0_i32 = arith.constant 0 : i32
    %c0_i32_0 = arith.constant 0 : i32
    return %arg0, %c0_i32 : i32, i32
  }
}

</mosaic_0001>

<llo_original>
// kernel: tpu_custom_call.1
$region0: #{tpu_custom_call.1}
  #allocation0 [shape = 'u32[]', space=smem, size = 0x4, offset = 0x4, fixed_abs, tag = 'smem constant byte address 0x4 - core index']
  #allocation1 [shape = 'u32[144,128]{1,0:T(1,128)}', space=vmem, size = 0x12000, scoped, tag = 'internal scratch']
  %s0 = inlined_call_operand.hbm [shape: bf16[32,128], index: 0, kind: input, shape index: {}]
  %s1 = inlined_call_operand.hbm [shape: f32[32,128], index: 1, kind: input, shape index: {}]
  %s2 = inlined_call_operand.hbm [shape: bf16[128,128], index: 2, kind: input, shape index: {}]
  %s3 = inlined_call_operand.vmem [shape: f32[1,128], index: 3, kind: input, shape index: {}]
  %s4 = inlined_call_operand.hbm [shape: bf16[128,256], index: 4, kind: input, shape index: {}]
  %s5 = inlined_call_operand.vmem [shape: f32[1,256], index: 5, kind: input, shape index: {}]
  %s6 = inlined_call_operand.hbm [shape: bf16[128,128], index: 6, kind: input, shape index: {}]
  %s7 = inlined_call_operand.vmem [shape: f32[1,128], index: 7, kind: input, shape index: {}]
  %s8 = inlined_call_operand.hbm [shape: f32[32,128], index: 8, kind: output, shape index: {0}]
  %s9 = inlined_call_operand.hbm [shape: f32[32,256], index: 9, kind: output, shape index: {1}]
  %10 = xla_tuple %s8, %s9
  %s11 = sld [smem:[#allocation0]]
  $region93: #{tpu_custom_call.1} parent=0
    _
  %s13 = ssub.s32 1, %s11
  %s14 = scalar_select 0, %s13, %s11
  $region1: #{tpu_custom_call.1} parent=0
    #allocation2 [shape = 'u8[8192]{0}', space=vmem, size = 0x2000, scoped, tag = 'input window, operand 0']
    #allocation3 [shape = 's32[2]{0}', space=sflag, size = 0x8, scoped, tag = 'scoped memory for tpu_custom_call.1']
    #allocation4 [shape = 's32[2]{0}', space=sflag, size = 0x8, scoped, tag = 'scoped memory for tpu_custom_call.1']
    #allocation5 [shape = 'u8[16384]{0}', space=vmem, size = 0x4000, scoped, tag = 'input window, operand 1']
    #allocation6 [shape = 's32[2]{0}', space=sflag, size = 0x8, scoped, tag = 'scoped memory for tpu_custom_call.1']
    #allocation7 [shape = 'u8[32768]{0}', space=vmem, size = 0x8000, scoped, tag = 'input window, operand 2, single buffered']
    #allocation8 [shape = 'u8[65536]{0}', space=vmem, size = 0x10000, scoped, tag = 'input window, operand 4, single buffered']
    #allocation9 [shape = 's32[1]{0}', space=sflag, size = 0x4, scoped, tag = 'scoped memory for tpu_custom_call.1']
    #allocation10 [shape = 'u8[32768]{0}', space=vmem, size = 0x8000, scoped, tag = 'input window, operand 6, single buffered']
    #allocation11 [shape = 'u8[16384]{0}', space=vmem, size = 0x4000, scoped, tag = 'output window, operand 0']
    #allocation12 [shape = 'u8[32768]{0}', space=vmem, size = 0x8000, scoped, tag = 'output window, operand 1']
    #allocation13 [shape = 's32[2]{0}', space=sflag, size = 0x8, scoped, tag = 'scoped memory for tpu_custom_call.1']
    %15 = vsyncpa [#allocation3], 0
    %s16 = scalar_lea.sflag [#allocation3], 1
    %17 = vsyncpa %s16, 0
    %18 = vsyncpa [#allocation6], 0
    %s19 = scalar_lea.sflag [#allocation6], 1
    %20 = vsyncpa %s19, 0
    %21 = vsyncpa [#allocation9], 0
    %22 = vsyncpa [#allocation4], 0
    %s23 = scalar_lea.sflag [#allocation4], 1
    %24 = vsyncpa %s23, 0
    %25 = vsyncpa [#allocation13], 0
    %s26 = scalar_lea.sflag [#allocation13], 1
    %27 = vsyncpa %s26, 0
    loop: start=0, step=1, limit=4
    $region2: #{tpu_custom_call.1} parent=1 // loop_pre_header
      _
    $region3: #{tpu_custom_call.1} parent=1 // loop_header
      %s29 = sphi 0, %s33
      %p30 = scmp.ge.s32.totalorder %s29, 4
      %s39 = sphi 0, %s41
      %s42 = sphi 0, %s39
      %s43 = sphi 0, %s42
      %s59 = sphi 0, %s43
      %s65 = sphi 0, %s67
      %s68 = sphi 0, %s65
      %s69 = sphi 0, %s68
      %s85 = sphi 0, %s69
      %s89 = sphi 0, %s89
      %s91 = sphi 0, %s89
      %s92 = sphi 0, %s91
      %s106 = sphi 0, %s92
      %s110 = sphi 0, %s110
      %s112 = sphi 0, %s110
      %s113 = sphi 0, %s112
      %s127 = sphi 0, %s113
      %s131 = sphi 0, %s131
      %s133 = sphi 0, %s131
      %s134 = sphi 0, %s133
      %s148 = sphi 0, %s134
      %s152 = sphi 0, %s152
      %s154 = sphi 0, %s152
      %s155 = sphi 0, %s154
      %s169 = sphi 0, %s155
      %s173 = sphi 0, %s173
      %s175 = sphi 0, %s173
      %s176 = sphi 0, %s175
      %s190 = sphi 0, %s176
      %s194 = sphi 0, %s194
      %s196 = sphi 0, %s194
      %s197 = sphi 0, %s196
      %s211 = sphi 0, %s197
      %s217 = sphi 0, %s219
      %s220 = sphi 0, %s217
      %s221 = sphi 0, %s220
      %s237 = sphi 0, %s221
      %s243 = sphi 0, %s245
      %s246 = sphi 0, %s243
      %s247 = sphi 0, %s246
      %s263 = sphi 0, %s247
    $region4: #{tpu_custom_call.1} parent=1 // loop_header_branch
      %32 = sbr.rel (%p30) target = $region8
    $region5: #{tpu_custom_call.1} parent=1 // loop_body
      %s34 = ssub.s32 %s29, 1
      %s35 = ssub.s32 %s29, 2
      %s36 = sadd.s32 %s29, 1
      %s37 = ssub.s32 %s29, %s36
      %p38 = scmp.eq.s32.totalorder %s37, 0
      %s40 = sadd.s32 %s39, 1
      %s41 = scalar_select %p38, %s39, %s40
      %p44 = pneg %p38
      %p45 = scmp.eq.s32.totalorder %s29, 1
      %p46 = por %p44, %p45
      %p47 = scmp.ne.s32.totalorder %s39, %s42
      %p48 = scmp.eq.s32.totalorder %s29, 0
      %p49 = por %p47, %p48
      %p50 = scmp.ne.s32.totalorder %s39, %s42
      %p51 = scmp.eq.s32.totalorder %s34, 1
      %p52 = por %p50, %p51
      %p53 = scmp.ne.s32.totalorder %s42, %s43
      %p54 = scmp.eq.s32.totalorder %s34, 0
      %p55 = por %p53, %p54
      %p56 = scmp.ne.s32.totalorder %s42, %s43
      %p57 = scmp.eq.s32.totalorder %s35, 1
      %p58 = por %p56, %p57
      %p60 = scmp.ne.s32.totalorder %s43, %s59
      %p61 = scmp.eq.s32.totalorder %s35, 0
      %p62 = por %p60, %p61
      %s63 = ssub.s32 %s29, %s36
      %p64 = scmp.eq.s32.totalorder %s63, 0
      %s66 = sadd.s32 %s65, 1
      %s67 = scalar_select %p64, %s65, %s66
      %p70 = pneg %p64
      %p71 = scmp.eq.s32.totalorder %s29, 1
      %p72 = por %p70, %p71
      %p73 = scmp.ne.s32.totalorder %s65, %s68
      %p74 = scmp.eq.s32.totalorder %s29, 0
      %p75 = por %p73, %p74
      %p76 = scmp.ne.s32.totalorder %s65, %s68
      %p77 = scmp.eq.s32.totalorder %s34, 1
      %p78 = por %p76, %p77
      %p79 = scmp.ne.s32.totalorder %s68, %s69
      %p80 = scmp.eq.s32.totalorder %s34, 0
      %p81 = por %p79, %p80
      %p82 = scmp.ne.s32.totalorder %s68, %s69
      %p83 = scmp.eq.s32.totalorder %s35, 1
      %p84 = por %p82, %p83
      %p86 = scmp.ne.s32.totalorder %s69, %s85
      %p87 = scmp.eq.s32.totalorder %s35, 0
      %p88 = por %p86, %p87
      %s90 = sadd.s32 %s89, 1
      %p93 = scmp.eq.s32.totalorder %s29, 1
      %p94 = scmp.ne.s32.totalorder %s89, %s91
      %p95 = scmp.eq.s32.totalorder %s29, 0
      %p96 = por %p94, %p95
      %p97 = scmp.ne.s32.totalorder %s89, %s91
      %p98 = scmp.eq.s32.totalorder %s34, 1
      %p99 = por %p97, %p98
      %p100 = scmp.ne.s32.totalorder %s91, %s92
      %p101 = scmp.eq.s32.totalorder %s34, 0
      %p102 = por %p100, %p101
      %p103 = scmp.ne.s32.totalorder %s91, %s92
      %p104 = scmp.eq.s32.totalorder %s35, 1
      %p105 = por %p103, %p104
      %p107 = scmp.ne.s32.totalorder %s92, %s106
      %p108 = scmp.eq.s32.totalorder %s35, 0
      %p109 = por %p107, %p108
      %s111 = sadd.s32 %s110, 1
      %p114 = scmp.eq.s32.totalorder %s29, 1
      %p115 = scmp.ne.s32.totalorder %s110, %s112
      %p116 = scmp.eq.s32.totalorder %s29, 0
      %p117 = por %p115, %p116
      %p118 = scmp.ne.s32.totalorder %s110, %s112
      %p119 = scmp.eq.s32.totalorder %s34, 1
      %p120 = por %p118, %p119
      %p121 = scmp.ne.s32.totalorder %s112, %s113
      %p122 = scmp.eq.s32.totalorder %s34, 0
      %p123 = por %p121, %p122
      %p124 = scmp.ne.s32.totalorder %s112, %s113
      %p125 = scmp.eq.s32.totalorder %s35, 1
      %p126 = por %p124, %p125
      %p128 = scmp.ne.s32.totalorder %s113, %s127
      %p129 = scmp.eq.s32.totalorder %s35, 0
      %p130 = por %p128, %p129
      %s132 = sadd.s32 %s131, 1
      %p135 = scmp.eq.s32.totalorder %s29, 1
      %p136 = scmp.ne.s32.totalorder %s131, %s133
      %p137 = scmp.eq.s32.totalorder %s29, 0
      %p138 = por %p136, %p137
      %p139 = scmp.ne.s32.totalorder %s131, %s133
      %p140 = scmp.eq.s32.totalorder %s34, 1
      %p141 = por %p139, %p140
      %p142 = scmp.ne.s32.totalorder %s133, %s134
      %p143 = scmp.eq.s32.totalorder %s34, 0
      %p144 = por %p142, %p143
      %p145 = scmp.ne.s32.totalorder %s133, %s134
      %p146 = scmp.eq.s32.totalorder %s35, 1
      %p147 = por %p145, %p146
      %p149 = scmp.ne.s32.totalorder %s134, %s148
      %p150 = scmp.eq.s32.totalorder %s35, 0
      %p151 = por %p149, %p150
      %s153 = sadd.s32 %s152, 1
      %p156 = scmp.eq.s32.totalorder %s29, 1
      %p157 = scmp.ne.s32.totalorder %s152, %s154
      %p158 = scmp.eq.s32.totalorder %s29, 0
      %p159 = por %p157, %p158
      %p160 = scmp.ne.s32.totalorder %s152, %s154
      %p161 = scmp.eq.s32.totalorder %s34, 1
      %p162 = por %p160, %p161
      %p163 = scmp.ne.s32.totalorder %s154, %s155
      %p164 = scmp.eq.s32.totalorder %s34, 0
      %p165 = por %p163, %p164
      %p166 = scmp.ne.s32.totalorder %s154, %s155
      %p167 = scmp.eq.s32.totalorder %s35, 1
      %p168 = por %p166, %p167
      %p170 = scmp.ne.s32.totalorder %s155, %s169
      %p171 = scmp.eq.s32.totalorder %s35, 0
      %p172 = por %p170, %p171
      %s174 = sadd.s32 %s173, 1
      %p177 = scmp.eq.s32.totalorder %s29, 1
      %p178 = scmp.ne.s32.totalorder %s173, %s175
      %p179 = scmp.eq.s32.totalorder %s29, 0
      %p180 = por %p178, %p179
      %p181 = scmp.ne.s32.totalorder %s173, %s175
      %p182 = scmp.eq.s32.totalorder %s34, 1
      %p183 = por %p181, %p182
      %p184 = scmp.ne.s32.totalorder %s175, %s176
      %p185 = scmp.eq.s32.totalorder %s34, 0
      %p186 = por %p184, %p185
      %p187 = scmp.ne.s32.totalorder %s175, %s176
      %p188 = scmp.eq.s32.totalorder %s35, 1
      %p189 = por %p187, %p188
      %p191 = scmp.ne.s32.totalorder %s176, %s190
      %p192 = scmp.eq.s32.totalorder %s35, 0
      %p193 = por %p191, %p192
      %s195 = sadd.s32 %s194, 1
      %p198 = scmp.eq.s32.totalorder %s29, 1
      %p199 = scmp.ne.s32.totalorder %s194, %s196
      %p200 = scmp.eq.s32.totalorder %s29, 0
      %p201 = por %p199, %p200
      %p202 = scmp.ne.s32.totalorder %s194, %s196
      %p203 = scmp.eq.s32.totalorder %s34, 1
      %p204 = por %p202, %p203
      %p205 = scmp.ne.s32.totalorder %s196, %s197
      %p206 = scmp.eq.s32.totalorder %s34, 0
      %p207 = por %p205, %p206
      %p208 = scmp.ne.s32.totalorder %s196, %s197
      %p209 = scmp.eq.s32.totalorder %s35, 1
      %p210 = por %p208, %p209
      %p212 = scmp.ne.s32.totalorder %s197, %s211
      %p213 = scmp.eq.s32.totalorder %s35, 0
      %p214 = por %p212, %p213
      %s215 = ssub.s32 %s29, %s36
      %p216 = scmp.eq.s32.totalorder %s215, 0
      %s218 = sadd.s32 %s217, 1
      %s219 = scalar_select %p216, %s217, %s218
      %p222 = pneg %p216
      %p223 = scmp.eq.s32.totalorder %s29, 1
      %p224 = por %p222, %p223
      %p225 = scmp.ne.s32.totalorder %s217, %s220
      %p226 = scmp.eq.s32.totalorder %s29, 0
      %p227 = por %p225, %p226
      %p228 = scmp.ne.s32.totalorder %s217, %s220
      %p229 = scmp.eq.s32.totalorder %s34, 1
      %p230 = por %p228, %p229
      %p231 = scmp.ne.s32.totalorder %s220, %s221
      %p232 = scmp.eq.s32.totalorder %s34, 0
      %p233 = por %p231, %p232
      %p234 = scmp.ne.s32.totalorder %s220, %s221
      %p235 = scmp.eq.s32.totalorder %s35, 1
      %p236 = por %p234, %p235
      %p238 = scmp.ne.s32.totalorder %s221, %s237
      %p239 = scmp.eq.s32.totalorder %s35, 0
      %p240 = por %p238, %p239
      %s241 = ssub.s32 %s29, %s36
      %p242 = scmp.eq.s32.totalorder %s241, 0
      %s244 = sadd.s32 %s243, 1
      %s245 = scalar_select %p242, %s243, %s244
      %p248 = pneg %p242
      %p249 = scmp.eq.s32.totalorder %s29, 1
      %p250 = por %p248, %p249
      %p251 = scmp.ne.s32.totalorder %s243, %s246
      %p252 = scmp.eq.s32.totalorder %s29, 0
      %p253 = por %p251, %p252
      %p254 = scmp.ne.s32.totalorder %s243, %s246
      %p255 = scmp.eq.s32.totalorder %s34, 1
      %p256 = por %p254, %p255
      %p257 = scmp.ne.s32.totalorder %s246, %s247
      %p258 = scmp.eq.s32.totalorder %s34, 0
      %p259 = por %p257, %p258
      %p260 = scmp.ne.s32.totalorder %s246, %s247
      %p261 = scmp.eq.s32.totalorder %s35, 1
      %p262 = por %p260, %p261
      %p264 = scmp.ne.s32.totalorder %s247, %s263
      %p265 = scmp.eq.s32.totalorder %s35, 0
      %p266 = por %p264, %p265
      %p267 = scmp.le.s32.totalorder 1, %s29
      %p268 = scmp.lt.s32.totalorder %s29, 3
      %p269 = pnand %p267, %p268
      %p270 = pneg %p269
      // Predicated region
      $region9: #{tpu_custom_call.1} parent=5 // pred_check
        _
      $region10: #{tpu_custom_call.1} parent=5 // pred_check_branch
        %272 = sbr.rel (%p269) target = $region12
      $region11: #{tpu_custom_call.1} parent=5 // pred_region
        %s273 = ssub.s32 %s29, 1
        // Predicated region
        $region13: #{tpu_custom_call.1} parent=11 // pred_check
          %p274 = pneg %p102
        $region14: #{tpu_custom_call.1} parent=11 // pred_check_branch
          %276 = sbr.rel (%p274) target = $region16
        $region15: #{tpu_custom_call.1} parent=11 // pred_region
          %s278 = ssub.s32 1024, 1024
          %279 = vsyncadd [#allocation6], %s278
          %s280 = sshll.u32 [#allocation7], 4
          %s281 = int_to_ptr.vmem [resolvable:$true] %s280
          %286 = dma.hbm_to_vmem [thread:$0]  %s2, 1024, %s281, [#allocation6], 64, 64, 4
        $region16: #{tpu_custom_call.1} parent=11 // pred_fallthru
          _
        // Predicated region
        $region17: #{tpu_custom_call.1} parent=11 // pred_check
          %p287 = pneg %p123
        $region18: #{tpu_custom_call.1} parent=11 // pred_check_branch
          %289 = sbr.rel (%p287) target = $region20
        $region19: #{tpu_custom_call.1} parent=11 // pred_region
          _
        $region20: #{tpu_custom_call.1} parent=11 // pred_fallthru
          _
        // Predicated region
        $region21: #{tpu_custom_call.1} parent=11 // pred_check
          %p290 = pneg %p144
        $region22: #{tpu_custom_call.1} parent=11 // pred_check_branch
          %292 = sbr.rel (%p290) target = $region24
        $region23: #{tpu_custom_call.1} parent=11 // pred_region
          %s294 = ssub.s32 2048, 2048
          %295 = vsyncadd [#allocation9], %s294
          %s296 = sshll.u32 [#allocation8], 4
          %s297 = int_to_ptr.vmem [resolvable:$true] %s296
          %302 = dma.hbm_to_vmem [thread:$0]  %s4, 2048, %s297, [#allocation9], 128, 128, 8
        $region24: #{tpu_custom_call.1} parent=11 // pred_fallthru
          _
        // Predicated region
        $region25: #{tpu_custom_call.1} parent=11 // pred_check
          %p303 = pneg %p165
        $region26: #{tpu_custom_call.1} parent=11 // pred_check_branch
          %305 = sbr.rel (%p303) target = $region28
        $region27: #{tpu_custom_call.1} parent=11 // pred_region
          _
        $region28: #{tpu_custom_call.1} parent=11 // pred_fallthru
          _
        // Predicated region
        $region29: #{tpu_custom_call.1} parent=11 // pred_check
          %p306 = pneg %p186
        $region30: #{tpu_custom_call.1} parent=11 // pred_check_branch
          %308 = sbr.rel (%p306) target = $region32
        $region31: #{tpu_custom_call.1} parent=11 // pred_region
          %s310 = ssub.s32 1024, 1024
          %311 = vsyncadd [#allocation9], %s310
          %s312 = sshll.u32 [#allocation10], 4
          %s313 = int_to_ptr.vmem [resolvable:$true] %s312
          %318 = dma.hbm_to_vmem [thread:$0]  %s6, 1024, %s313, [#allocation9], 64, 64, 4
        $region32: #{tpu_custom_call.1} parent=11 // pred_fallthru
          _
        // Predicated region
        $region33: #{tpu_custom_call.1} parent=11 // pred_check
          %p319 = pneg %p207
        $region34: #{tpu_custom_call.1} parent=11 // pred_check_branch
          %321 = sbr.rel (%p319) target = $region36
        $region35: #{tpu_custom_call.1} parent=11 // pred_region
          _
        $region36: #{tpu_custom_call.1} parent=11 // pred_fallthru
          _
      $region12: #{tpu_custom_call.1} parent=5 // pred_fallthru
        _
      %p322 = scmp.lt.s32.totalorder %s29, 2
      // Predicated region
      $region37: #{tpu_custom_call.1} parent=5 // pred_check
        %p323 = pneg %p322
      $region38: #{tpu_custom_call.1} parent=5 // pred_check_branch
        %325 = sbr.rel (%p323) target = $region40
      $region39: #{tpu_custom_call.1} parent=5 // pred_region
        // Predicated region
        $region41: #{tpu_custom_call.1} parent=39 // pred_check
          %p326 = pneg %p49
        $region42: #{tpu_custom_call.1} parent=39 // pred_check_branch
          %328 = sbr.rel (%p326) target = $region44
        $region43: #{tpu_custom_call.1} parent=39 // pred_region
          %s329 = sand.u32 %s39, 1
          %s330 = scalar_lea.sflag [#allocation3], %s329
          %s331 = sand.u32 %s39, 1
          %s332 = smul.addr %s331, 8
          %s333 = scalar_lea.vmem [#allocation2], %s332
          %s334 = smul.u32 2, %s29
          %s336 = ssub.s32 128, 128
          %337 = vsyncadd %s330, %s336
          %s338 = smul.addr %s334, 64
          %s339 = scalar_lea.hbm %s0, %s338
          %s340 = sshll.u32 %s333, 4
          %s341 = int_to_ptr.vmem [resolvable:$true] %s340
          %346 = dma.hbm_to_vmem [thread:$0]  %s339, 128, %s341, %s330, 64, 64, 4
        $region44: #{tpu_custom_call.1} parent=39 // pred_fallthru
          _
        // Predicated region
        $region45: #{tpu_custom_call.1} parent=39 // pred_check
          %p347 = pneg %p75
        $region46: #{tpu_custom_call.1} parent=39 // pred_check_branch
          %349 = sbr.rel (%p347) target = $region48
        $region47: #{tpu_custom_call.1} parent=39 // pred_region
          %s350 = sand.u32 %s29, 1
          %s351 = scalar_lea.sflag [#allocation6], %s350
          %s352 = sand.u32 %s65, 1
          %s353 = smul.addr %s352, 16
          %s354 = scalar_lea.vmem [#allocation5], %s353
          %s355 = smul.u32 2, %s29
          %s357 = ssub.s32 256, 256
          %358 = vsyncadd %s351, %s357
          %s359 = smul.addr %s355, 128
          %s360 = scalar_lea.hbm %s1, %s359
          %s361 = sshll.u32 %s354, 4
          %s362 = int_to_ptr.vmem [resolvable:$true] %s361
          %367 = dma.hbm_to_vmem [thread:$0]  %s360, 256, %s362, %s351, 128, 128, 8
        $region48: #{tpu_custom_call.1} parent=39 // pred_fallthru
          _
      $region40: #{tpu_custom_call.1} parent=5 // pred_fallthru
        _
      %p368 = scmp.le.s32.totalorder 1, %s29
      %p369 = scmp.lt.s32.totalorder %s29, 3
      %p370 = pnand %p368, %p369
      %p371 = pneg %p370
      // Predicated region
      $region49: #{tpu_custom_call.1} parent=5 // pred_check
        _
      $region50: #{tpu_custom_call.1} parent=5 // pred_check_branch
        %373 = sbr.rel (%p370) target = $region52
      $region51: #{tpu_custom_call.1} parent=5 // pred_region
        %s374 = ssub.s32 %s29, 1
        %s375 = sand.u32 %s42, 1
        %s376 = scalar_lea.sflag [#allocation3], %s375
        %s377 = sand.u32 %s42, 1
        %s378 = smul.addr %s377, 8
        %s379 = scalar_lea.vmem [#allocation2], %s378
        // Predicated region
        $region53: #{tpu_custom_call.1} parent=51 // pred_check
          %p380 = pneg %p55
        $region54: #{tpu_custom_call.1} parent=51 // pred_check_branch
          %382 = sbr.rel (%p380) target = $region56
        $region55: #{tpu_custom_call.1} parent=51 // pred_region
          %383 = dma.done %s376, 128
        $region56: #{tpu_custom_call.1} parent=51 // pred_fallthru
          _
        %s384 = sand.u32 %s34, 1
        %s385 = scalar_lea.sflag [#allocation6], %s384
        %s386 = sand.u32 %s68, 1
        %s387 = smul.addr %s386, 16
        %s388 = scalar_lea.vmem [#allocation5], %s387
        // Predicated region
        $region57: #{tpu_custom_call.1} parent=51 // pred_check
          %p389 = pneg %p81
        $region58: #{tpu_custom_call.1} parent=51 // pred_check_branch
          %391 = sbr.rel (%p389) target = $region60
        $region59: #{tpu_custom_call.1} parent=51 // pred_region
          %392 = dma.done %s385, 256
        $region60: #{tpu_custom_call.1} parent=51 // pred_fallthru
          _
        // Predicated region
        $region61: #{tpu_custom_call.1} parent=51 // pred_check
          %p393 = pneg %p102
        $region62: #{tpu_custom_call.1} parent=51 // pred_check_branch
          %395 = sbr.rel (%p393) target = $region64
        $region63: #{tpu_custom_call.1} parent=51 // pred_region
          %396 = dma.done [#allocation6], 1024
        $region64: #{tpu_custom_call.1} parent=51 // pred_fallthru
          _
        // Predicated region
        $region65: #{tpu_custom_call.1} parent=51 // pred_check
          %p397 = pneg %p144
        $region66: #{tpu_custom_call.1} parent=51 // pred_check_branch
          %399 = sbr.rel (%p397) target = $region68
        $region67: #{tpu_custom_call.1} parent=51 // pred_region
          %400 = dma.done [#allocation9], 2048
        $region68: #{tpu_custom_call.1} parent=51 // pred_fallthru
          _
        // Predicated region
        $region69: #{tpu_custom_call.1} parent=51 // pred_check
          %p401 = pneg %p186
        $region70: #{tpu_custom_call.1} parent=51 // pred_check_branch
          %403 = sbr.rel (%p401) target = $region72
        $region71: #{tpu_custom_call.1} parent=51 // pred_region
          %404 = dma.done [#allocation9], 1024
        $region72: #{tpu_custom_call.1} parent=51 // pred_fallthru
          _
        %s405 = sand.u32 %s42, 1
        %s406 = scalar_lea.sflag [#allocation3], %s405
        %s407 = sand.u32 %s42, 1
        %s408 = smul.addr %s407, 8
        %s409 = scalar_lea.vmem [#allocation2], %s408
        %p410 = pneg %p55
        %p411 = pneg %p52
        %s412 = sand.u32 %s34, 1
        %s413 = scalar_lea.sflag [#allocation6], %s412
        %s414 = sand.u32 %s68, 1
        %s415 = smul.addr %s414, 16
        %s416 = scalar_lea.vmem [#allocation5], %s415
        %p417 = pneg %p81
        %p418 = pneg %p78
        %p419 = pneg %p102
        %p420 = pneg %p99
        %p421 = pneg %p123
        %p422 = pneg %p120
        %p423 = pneg %p144
        %p424 = pneg %p141
        %p425 = pneg %p165
        %p426 = pneg %p162
        %p427 = pneg %p186
        %p428 = pneg %p183
        %p429 = pneg %p207
        %p430 = pneg %p204
        %p431 = pneg %p233
        %p432 = pneg %p230
        %s433 = sand.u32 %s220, 1
        %s434 = scalar_lea.sflag [#allocation4], %s433
        %s435 = sand.u32 %s220, 1
        %s436 = smul.addr %s435, 16
        %s437 = scalar_lea.vmem [#allocation11], %s436
        %p438 = pneg %p259
        %p439 = pneg %p256
        %s440 = sand.u32 %s246, 1
        %s441 = scalar_lea.sflag [#allocation13], %s440
        %s442 = sand.u32 %s246, 1
        %s443 = smul.addr %s442, 32
        %s444 = scalar_lea.vmem [#allocation12], %s443
        %s445 = smul.u32 2, %s34
        %s446 = smul.u32 2, %s34
        %s447 = smul.u32 2, %s34
        %s448 = smul.u32 2, %s34
        %v450 = vld [vmem:[%s379] sm:$0xf]
        %v451 = vld [vmem:[%s379 + $0x4] sm:$0xf]
        %v452 = vld [vmem:[#allocation7] sm:$0xf]
        %v453 = vld [vmem:[#allocation7 + $0x4] sm:$0xf]
        %v454 = vld [vmem:[#allocation7 + $0x8] sm:$0xf]
        %v455 = vld [vmem:[#allocation7 + $0xc] sm:$0xf]
        %v456 = vld [vmem:[#allocation7 + $0x10] sm:$0xf]
        %v457 = vld [vmem:[#allocation7 + $0x14] sm:$0xf]
        %v458 = vld [vmem:[#allocation7 + $0x18] sm:$0xf]
        %v459 = vld [vmem:[#allocation7 + $0x1c] sm:$0xf]
        %v460 = vld [vmem:[#allocation7 + $0x20] sm:$0xf]
        %v461 = vld [vmem:[#allocation7 + $0x24] sm:$0xf]
        %v462 = vld [vmem:[#allocation7 + $0x28] sm:$0xf]
        %v463 = vld [vmem:[#allocation7 + $0x2c] sm:$0xf]
        %v464 = vld [vmem:[#allocation7 + $0x30] sm:$0xf]
        %v465 = vld [vmem:[#allocation7 + $0x34] sm:$0xf]
        %v466 = vld [vmem:[#allocation7 + $0x38] sm:$0xf]
        %v467 = vld [vmem:[#allocation7 + $0x3c] sm:$0xf]
        %v468 = vld [vmem:[%s3] sm:$0x1]
        %v470 = vlaneseq
        %v471 = vshrl.u32 %v470, 7
        %v472 = vsub.s32 0, %v471
        %v473 = vrot.slane %v468, %v472
        %v477 = vunpack.c.l.b16 %v450
        %v478 = vunpack.c.l.b16 %v451
        %v479 = vpack.c.b16 %v478, %v477
        %v497 = vunpack.c.l.b16 %v452
        %v498 = vunpack.c.l.b16 %v453
        %v499 = vunpack.c.l.b16 %v454
        %v500 = vunpack.c.l.b16 %v455
        %v501 = vunpack.c.l.b16 %v456
        %v502 = vunpack.c.l.b16 %v457
        %v503 = vunpack.c.l.b16 %v458
        %v504 = vunpack.c.l.b16 %v459
        %v505 = vunpack.c.l.b16 %v460
        %v506 = vunpack.c.l.b16 %v461
        %v507 = vunpack.c.l.b16 %v462
        %v508 = vunpack.c.l.b16 %v463
        %v509 = vunpack.c.l.b16 %v464
        %v510 = vunpack.c.l.b16 %v465
        %v511 = vunpack.c.l.b16 %v466
        %v512 = vunpack.c.l.b16 %v467
        %v513 = vpack.c.b16 %v498, %v497
        %v514 = vpack.c.b16 %v500, %v499
        %v515 = vpack.c.b16 %v502, %v501
        %v516 = vpack.c.b16 %v504, %v503
        %v517 = vpack.c.b16 %v506, %v505
        %v518 = vpack.c.b16 %v508, %v507
        %v519 = vpack.c.b16 %v510, %v509
        %v520 = vpack.c.b16 %v512, %v511
        %529 = vmatprep.subr.bf16.mxu0 0
        %530 = vmatpush1.bf16.msra.mxu0 %v513
        %531 = vmatprep.subr.bf16.mxu0 0
        %532 = vmatpush1.bf16.msra.mxu0 %v514
        %533 = vmatprep.subr.bf16.mxu0 0
        %534 = vmatpush1.bf16.msra.mxu0 %v515
        %535 = vmatprep.subr.bf16.mxu0 0
        %536 = vmatpush1.bf16.msra.mxu0 %v516
        %537 = vmatprep.subr.bf16.mxu0 0
        %538 = vmatpush1.bf16.msra.mxu0 %v517
        %539 = vmatprep.subr.bf16.mxu0 0
        %540 = vmatpush1.bf16.msra.mxu0 %v518
        %541 = vmatprep.subr.bf16.mxu0 0
        %542 = vmatpush1.bf16.msra.mxu0 %v519
        %543 = vmatprep.subr.bf16.mxu0 0
        %544 = vmatpush1.bf16.msra.mxu0 %v520
        %545 = vmatprep.subr.bf16.mxu0 0
        %546 = vmatpush1.bf16.msra.mxu0 0
        %547 = vmatprep.subr.bf16.mxu0 0
        %548 = vmatpush1.bf16.msra.mxu0 0
        %549 = vmatprep.subr.bf16.mxu0 0
        %550 = vmatpush1.bf16.msra.mxu0 0
        %551 = vmatprep.subr.bf16.mxu0 0
        %552 = vmatpush1.bf16.msra.mxu0 0
        %553 = vmatprep.subr.bf16.mxu0 0
        %554 = vmatpush1.bf16.msra.mxu0 0
        %555 = vmatprep.subr.bf16.mxu0 0
        %556 = vmatpush1.bf16.msra.mxu0 0
        %557 = vmatprep.subr.bf16.mxu0 0
        %558 = vmatpush1.bf16.msra.mxu0 0
        %559 = vmatprep.subr.bf16.mxu0 0
        %560 = vmatpush1.bf16.msra.mxu0 0
        %561 = vmatprep.mubr.bf16.mxu0 0
        %562 = vmatmul.mubr.bf16.gmra.mrb[0].mxu0 %v479
        %v563 = vpop.f32.mrb[0].mxu0
        %v564 = vadd.f32 %v473, %v563
        %v565 = vpop.f32.mrb[0].mxu0
        %v566 = vpop.f32.mrb[0].mxu0
        %v567 = vadd.f32 %v473, %v566
        %v568 = vpop.f32.mrb[0].mxu0
        %569 = vdwg.mxu0
        %v570 = vmax.f32 %v564, 0.0
        %v571 = vmax.f32 %v567, 0.0
        %v572 = vpack.c.bf16 %v571, %v570
        %v573 = vld [vmem:[#allocation8] sm:$0xff]
        %v574 = vld [vmem:[#allocation8 + $0x8] sm:$0xff]
        %v575 = vld [vmem:[#allocation8 + $0x10] sm:$0xff]
        %v576 = vld [vmem:[#allocation8 + $0x18] sm:$0xff]
        %v577 = vld [vmem:[#allocation8 + $0x20] sm:$0xff]
        %v578 = vld [vmem:[#allocation8 + $0x28] sm:$0xff]
        %v579 = vld [vmem:[#allocation8 + $0x30] sm:$0xff]
        %v580 = vld [vmem:[#allocation8 + $0x38] sm:$0xff]
        %v581 = vld [vmem:[#allocation8 + $0x40] sm:$0xff]
        %v582 = vld [vmem:[#allocation8 + $0x48] sm:$0xff]
        %v583 = vld [vmem:[#allocation8 + $0x50] sm:$0xff]
        %v584 = vld [vmem:[#allocation8 + $0x58] sm:$0xff]
        %v585 = vld [vmem:[#allocation8 + $0x60] sm:$0xff]
        %v586 = vld [vmem:[#allocation8 + $0x68] sm:$0xff]
        %v587 = vld [vmem:[#allocation8 + $0x70] sm:$0xff]
        %v588 = vld [vmem:[#allocation8 + $0x78] sm:$0xff]
        %v589 = vld [vmem:[%s5] sm:$0x3]
        %v591 = vlaneseq
        %v592 = vshrl.u32 %v591, 7
        %v593 = vsub.s32 0, %v592
        %v594 = vrot.slane %v589, %v593
        %v595 = vlaneseq
        %v596 = vshrl.u32 %v595, 7
        %v597 = vsub.s32 1, %v596
        %v598 = vrot.slane %v589, %v597
        %v617 = vunpack.c.l.b16 %v573
        %v618 = vunpack.c.h.b16 %v573
        %v619 = vunpack.c.l.b16 %v574
        %v620 = vunpack.c.h.b16 %v574
        %v621 = vunpack.c.l.b16 %v575
        %v622 = vunpack.c.h.b16 %v575
        %v623 = vunpack.c.l.b16 %v576
        %v624 = vunpack.c.h.b16 %v576
        %v625 = vunpack.c.l.b16 %v577
        %v626 = vunpack.c.h.b16 %v577
        %v627 = vunpack.c.l.b16 %v578
        %v628 = vunpack.c.h.b16 %v578
        %v629 = vunpack.c.l.b16 %v579
        %v630 = vunpack.c.h.b16 %v579
        %v631 = vunpack.c.l.b16 %v580
        %v632 = vunpack.c.h.b16 %v580
        %v633 = vunpack.c.l.b16 %v581
        %v634 = vunpack.c.h.b16 %v581
        %v635 = vunpack.c.l.b16 %v582
        %v636 = vunpack.c.h.b16 %v582
        %v637 = vunpack.c.l.b16 %v583
        %v638 = vunpack.c.h.b16 %v583
        %v639 = vunpack.c.l.b16 %v584
        %v640 = vunpack.c.h.b16 %v584
        %v641 = vunpack.c.l.b16 %v585
        %v642 = vunpack.c.h.b16 %v585
        %v643 = vunpack.c.l.b16 %v586
        %v644 = vunpack.c.h.b16 %v586
        %v645 = vunpack.c.l.b16 %v587
        %v646 = vunpack.c.h.b16 %v587
        %v647 = vunpack.c.l.b16 %v588
        %v648 = vunpack.c.h.b16 %v588
        %v649 = vpack.c.b16 %v619, %v617
        %v650 = vpack.c.b16 %v620, %v618
        %v651 = vpack.c.b16 %v623, %v621
        %v652 = vpack.c.b16 %v624, %v622
        %v653 = vpack.c.b16 %v627, %v625
        %v654 = vpack.c.b16 %v628, %v626
        %v655 = vpack.c.b16 %v631, %v629
        %v656 = vpack.c.b16 %v632, %v630
        %v657 = vpack.c.b16 %v635, %v633
        %v658 = vpack.c.b16 %v636, %v634
        %v659 = vpack.c.b16 %v639, %v637
        %v660 = vpack.c.b16 %v640, %v638
        %v661 = vpack.c.b16 %v643, %v641
        %v662 = vpack.c.b16 %v644, %v642
        %v663 = vpack.c.b16 %v647, %v645
        %v664 = vpack.c.b16 %v648, %v646
        %681 = vmatprep.subr.bf16.mxu0 %v650
        %682 = vmatpush1.bf16.msra.mxu0 %v649
        %683 = vmatprep.subr.bf16.mxu0 %v652
        %684 = vmatpush1.bf16.msra.mxu0 %v651
        %685 = vmatprep.subr.bf16.mxu0 %v654
        %686 = vmatpush1.bf16.msra.mxu0 %v653
        %687 = vmatprep.subr.bf16.mxu0 %v656
        %688 = vmatpush1.bf16.msra.mxu0 %v655
        %689 = vmatprep.subr.bf16.mxu0 %v658
        %690 = vmatpush1.bf16.msra.mxu0 %v657
        %691 = vmatprep.subr.bf16.mxu0 %v660
        %692 = vmatpush1.bf16.msra.mxu0 %v659
        %693 = vmatprep.subr.bf16.mxu0 %v662
        %694 = vmatpush1.bf16.msra.mxu0 %v661
        %695 = vmatprep.subr.bf16.mxu0 %v664
        %696 = vmatpush1.bf16.msra.mxu0 %v663
        %697 = vmatprep.subr.bf16.mxu0 0
        %698 = vmatpush1.bf16.msra.mxu0 0
        %699 = vmatprep.subr.bf16.mxu0 0
        %700 = vmatpush1.bf16.msra.mxu0 0
        %701 = vmatprep.subr.bf16.mxu0 0
        %702 = vmatpush1.bf16.msra.mxu0 0
        %703 = vmatprep.subr.bf16.mxu0 0
        %704 = vmatpush1.bf16.msra.mxu0 0
        %705 = vmatprep.subr.bf16.mxu0 0
        %706 = vmatpush1.bf16.msra.mxu0 0
        %707 = vmatprep.subr.bf16.mxu0 0
        %708 = vmatpush1.bf16.msra.mxu0 0
        %709 = vmatprep.subr.bf16.mxu0 0
        %710 = vmatpush1.bf16.msra.mxu0 0
        %711 = vmatprep.subr.bf16.mxu0 0
        %712 = vmatpush1.bf16.msra.mxu0 0
        %713 = vmatprep.mubr.bf16.mxu0 0
        %714 = vmatmul.mubr.bf16.gmra.mrb[0].mxu0 %v572
        %v715 = vpop.f32.mrb[0].mxu0
        %v716 = vadd.f32 %v594, %v715
        %v717 = vpop.f32.mrb[0].mxu0
        %v718 = vadd.f32 %v598, %v717
        %v719 = vpop.f32.mrb[0].mxu0
        %v720 = vadd.f32 %v594, %v719
        %v721 = vpop.f32.mrb[0].mxu0
        %v722 = vadd.f32 %v598, %v721
        %723 = vdwg.mxu0
        %v724 = vmul.f32 %v718, 0.5
        %v725 = vmul.f32 %v722, 0.5
        %v726 = vmul.f32 %v724, 1.442695
        %v727 = vpow.pop %v726
        %v728 = vmul.f32 %v725, 1.442695
        %v729 = vpow.pop %v728
        %v730 = vld [vmem:[%s388] sm:$0xff]
        %v731 = vld [vmem:[%s388 + $0x8] sm:$0xff]
        %v732 = vmul.f32 %v727, %v730
        %v733 = vmul.f32 %v729, %v731
        %v734 = vadd.f32 %v716, %v732
        %v735 = vadd.f32 %v720, %v733
        %v736 = vpack.c.bf16 %v735, %v734
        %v737 = vld [vmem:[#allocation10] sm:$0xf]
        %v738 = vld [vmem:[#allocation10 + $0x4] sm:$0xf]
        %v739 = vld [vmem:[#allocation10 + $0x8] sm:$0xf]
        %v740 = vld [vmem:[#allocation10 + $0xc] sm:$0xf]
        %v741 = vld [vmem:[#allocation10 + $0x10] sm:$0xf]
        %v742 = vld [vmem:[#allocation10 + $0x14] sm:$0xf]
        %v743 = vld [vmem:[#allocation10 + $0x18] sm:$0xf]
        %v744 = vld [vmem:[#allocation10 + $0x1c] sm:$0xf]
        %v745 = vld [vmem:[#allocation10 + $0x20] sm:$0xf]
        %v746 = vld [vmem:[#allocation10 + $0x24] sm:$0xf]
        %v747 = vld [vmem:[#allocation10 + $0x28] sm:$0xf]
        %v748 = vld [vmem:[#allocation10 + $0x2c] sm:$0xf]
        %v749 = vld [vmem:[#allocation10 + $0x30] sm:$0xf]
        %v750 = vld [vmem:[#allocation10 + $0x34] sm:$0xf]
        %v751 = vld [vmem:[#allocation10 + $0x38] sm:$0xf]
        %v752 = vld [vmem:[#allocation10 + $0x3c] sm:$0xf]
        %v753 = vld [vmem:[%s7] sm:$0x1]
        %v755 = vlaneseq
        %v756 = vshrl.u32 %v755, 7
        %v757 = vsub.s32 0, %v756
        %v758 = vrot.slane %v753, %v757
        %v776 = vunpack.c.l.b16 %v737
        %v777 = vunpack.c.l.b16 %v738
        %v778 = vunpack.c.l.b16 %v739
        %v779 = vunpack.c.l.b16 %v740
        %v780 = vunpack.c.l.b16 %v741
        %v781 = vunpack.c.l.b16 %v742
        %v782 = vunpack.c.l.b16 %v743
        %v783 = vunpack.c.l.b16 %v744
        %v784 = vunpack.c.l.b16 %v745
        %v785 = vunpack.c.l.b16 %v746
        %v786 = vunpack.c.l.b16 %v747
        %v787 = vunpack.c.l.b16 %v748
        %v788 = vunpack.c.l.b16 %v749
        %v789 = vunpack.c.l.b16 %v750
        %v790 = vunpack.c.l.b16 %v751
        %v791 = vunpack.c.l.b16 %v752
        %v792 = vpack.c.b16 %v777, %v776
        %v793 = vpack.c.b16 %v779, %v778
        %v794 = vpack.c.b16 %v781, %v780
        %v795 = vpack.c.b16 %v783, %v782
        %v796 = vpack.c.b16 %v785, %v784
        %v797 = vpack.c.b16 %v787, %v786
        %v798 = vpack.c.b16 %v789, %v788
        %v799 = vpack.c.b16 %v791, %v790
        %808 = vmatprep.subr.bf16.mxu0 0
        %809 = vmatpush1.bf16.msra.mxu0 %v792
        %810 = vmatprep.subr.bf16.mxu0 0
        %811 = vmatpush1.bf16.msra.mxu0 %v793
        %812 = vmatprep.subr.bf16.mxu0 0
        %813 = vmatpush1.bf16.msra.mxu0 %v794
        %814 = vmatprep.subr.bf16.mxu0 0
        %815 = vmatpush1.bf16.msra.mxu0 %v795
        %816 = vmatprep.subr.bf16.mxu0 0
        %817 = vmatpush1.bf16.msra.mxu0 %v796
        %818 = vmatprep.subr.bf16.mxu0 0
        %819 = vmatpush1.bf16.msra.mxu0 %v797
        %820 = vmatprep.subr.bf16.mxu0 0
        %821 = vmatpush1.bf16.msra.mxu0 %v798
        %822 = vmatprep.subr.bf16.mxu0 0
        %823 = vmatpush1.bf16.msra.mxu0 %v799
        %824 = vmatprep.subr.bf16.mxu0 0
        %825 = vmatpush1.bf16.msra.mxu0 0
        %826 = vmatprep.subr.bf16.mxu0 0
        %827 = vmatpush1.bf16.msra.mxu0 0
        %828 = vmatprep.subr.bf16.mxu0 0
        %829 = vmatpush1.bf16.msra.mxu0 0
        %830 = vmatprep.subr.bf16.mxu0 0
        %831 = vmatpush1.bf16.msra.mxu0 0
        %832 = vmatprep.subr.bf16.mxu0 0
        %833 = vmatpush1.bf16.msra.mxu0 0
        %834 = vmatprep.subr.bf16.mxu0 0
        %835 = vmatpush1.bf16.msra.mxu0 0
        %836 = vmatprep.subr.bf16.mxu0 0
        %837 = vmatpush1.bf16.msra.mxu0 0
        %838 = vmatprep.subr.bf16.mxu0 0
        %839 = vmatpush1.bf16.msra.mxu0 0
        %840 = vmatprep.mubr.bf16.mxu0 0
        %841 = vmatmul.mubr.bf16.gmra.mrb[0].mxu0 %v736
        %v842 = vpop.f32.mrb[0].mxu0
        %v843 = vadd.f32 %v758, %v842
        %v844 = vpop.f32.mrb[0].mxu0
        %v845 = vpop.f32.mrb[0].mxu0
        %v846 = vadd.f32 %v758, %v845
        %v847 = vpop.f32.mrb[0].mxu0
        %848 = vdwg.mxu0
        %v849 = vxor.u32 %v843, 2147483648
        %v850 = vxor.u32 %v846, 2147483648
        %v851 = vmul.f32 %v849, 1.442695
        %v852 = vpow.pop %v851
        %v853 = vmul.f32 %v850, 1.442695
        %v854 = vpow.pop %v853
        %v855 = vadd.f32 %v852, 1.0
        %v856 = vadd.f32 %v854, 1.0
        %v857 = vrcp.pop %v855
        %v858 = vmul.f32 1.0, %v857
        %v859 = vrcp.pop %v856
        %v860 = vmul.f32 1.0, %v859
        %861 = vst [vmem:[%s437] sm:$0xff] %v858
        %862 = vst [vmem:[%s437 + $0x8] sm:$0xff] %v860
        %863 = vst [vmem:[%s444] sm:$0xff] %v716
        %864 = vst [vmem:[%s444 + $0x8] sm:$0xff] %v718
        %865 = vst [vmem:[%s444 + $0x10] sm:$0xff] %v720
        %866 = vst [vmem:[%s444 + $0x18] sm:$0xff] %v722
        %s867 = sand.u32 %s220, 1
        %s868 = scalar_lea.sflag [#allocation4], %s867
        %s869 = sand.u32 %s220, 1
        %s870 = smul.addr %s869, 16
        %s871 = scalar_lea.vmem [#allocation11], %s870
        %s872 = sand.u32 %s246, 1
        %s873 = scalar_lea.sflag [#allocation13], %s872
        %s874 = sand.u32 %s246, 1
        %s875 = smul.addr %s874, 32
        %s876 = scalar_lea.vmem [#allocation12], %s875
        // Predicated region
        $region73: #{tpu_custom_call.1} parent=51 // pred_check
          %p877 = pneg %p230
        $region74: #{tpu_custom_call.1} parent=51 // pred_check_branch
          %879 = sbr.rel (%p877) target = $region76
        $region75: #{tpu_custom_call.1} parent=51 // pred_region
          %s880 = smul.u32 2, %s34
          %s882 = ssub.s32 256, 256
          %883 = vsyncadd %s868, %s882
          %s884 = smul.addr %s880, 128
          %s885 = scalar_lea.hbm %s8, %s884
          %s886 = sshll.u32 %s871, 4
          %s887 = int_to_ptr.vmem [resolvable:$true] %s886
          %892 = dma.vmem_to_hbm [thread:$0]  %s887, 256, %s885, %s868, 128, 128, 8
        $region76: #{tpu_custom_call.1} parent=51 // pred_fallthru
          _
        // Predicated region
        $region77: #{tpu_custom_call.1} parent=51 // pred_check
          %p893 = pneg %p256
        $region78: #{tpu_custom_call.1} parent=51 // pred_check_branch
          %895 = sbr.rel (%p893) target = $region80
        $region79: #{tpu_custom_call.1} parent=51 // pred_region
          %s896 = smul.u32 2, %s34
          %s898 = ssub.s32 512, 512
          %899 = vsyncadd %s873, %s898
          %s900 = smul.addr %s896, 2
          %s901 = smul.addr %s900, 128
          %s902 = scalar_lea.hbm %s9, %s901
          %s903 = sshll.u32 %s876, 4
          %s904 = int_to_ptr.vmem [resolvable:$true] %s903
          %909 = dma.vmem_to_hbm [thread:$0]  %s904, 512, %s902, %s873, 256, 256, 16
        $region80: #{tpu_custom_call.1} parent=51 // pred_fallthru
          _
      $region52: #{tpu_custom_call.1} parent=5 // pred_fallthru
        _
      %p910 = scmp.le.s32.totalorder 2, %s29
      // Predicated region
      $region81: #{tpu_custom_call.1} parent=5 // pred_check
        %p911 = pneg %p910
      $region82: #{tpu_custom_call.1} parent=5 // pred_check_branch
        %913 = sbr.rel (%p911) target = $region84
      $region83: #{tpu_custom_call.1} parent=5 // pred_region
        %s914 = ssub.s32 %s29, 2
        // Predicated region
        $region85: #{tpu_custom_call.1} parent=83 // pred_check
          %p915 = pneg %p236
        $region86: #{tpu_custom_call.1} parent=83 // pred_check_branch
          %917 = sbr.rel (%p915) target = $region88
        $region87: #{tpu_custom_call.1} parent=83 // pred_region
          %s918 = sand.u32 %s221, 1
          %s919 = scalar_lea.sflag [#allocation4], %s918
          %s920 = sand.u32 %s221, 1
          %s921 = smul.addr %s920, 16
          %s922 = scalar_lea.vmem [#allocation11], %s921
          %923 = dma.done %s919, 256
        $region88: #{tpu_custom_call.1} parent=83 // pred_fallthru
          _
        // Predicated region
        $region89: #{tpu_custom_call.1} parent=83 // pred_check
          %p924 = pneg %p262
        $region90: #{tpu_custom_call.1} parent=83 // pred_check_branch
          %926 = sbr.rel (%p924) target = $region92
        $region91: #{tpu_custom_call.1} parent=83 // pred_region
          %s927 = sand.u32 %s247, 1
          %s928 = scalar_lea.sflag [#allocation13], %s927
          %s929 = sand.u32 %s247, 1
          %s930 = smul.addr %s929, 32
          %s931 = scalar_lea.vmem [#allocation12], %s930
          %932 = dma.done %s928, 512
        $region92: #{tpu_custom_call.1} parent=83 // pred_fallthru
          _
      $region84: #{tpu_custom_call.1} parent=5 // pred_fallthru
        _
    $region6: #{tpu_custom_call.1} parent=1 // loop_footer
      %s33 = sadd.s32 1, %s29
    $region7: #{tpu_custom_call.1} parent=1 // loop_footer_branch
      %28 = sbr.rel target = $region3
    $region8: #{tpu_custom_call.1} parent=1 // loop_exit
      _
    %933 = vsyncpa [#allocation3], 1
    %s934 = scalar_lea.sflag [#allocation3], 1
    %935 = vsyncpa %s934, 1
    %936 = vsyncpa [#allocation6], 1
    %s937 = scalar_lea.sflag [#allocation6], 1
    %938 = vsyncpa %s937, 1
    %939 = vsyncpa [#allocation9], 1
    %940 = vsyncpa [#allocation4], 1
    %s941 = scalar_lea.sflag [#allocation4], 1
    %942 = vsyncpa %s941, 1
    %943 = vsyncpa [#allocation13], 1
    %s944 = scalar_lea.sflag [#allocation13], 1
    %945 = vsyncpa %s944, 1

// kernel: tpu_custom_call.1
$region0: #{tpu_custom_call.1}
  #allocation0 [shape = 'u32[]', space=smem, size = 0x4, offset = 0x4, fixed_abs, tag = 'smem constant byte address 0x4 - core index']
  #allocation1 [shape = 'u32[144,128]{1,0:T(1,128)}', space=vmem, size = 0x12000, scoped, tag = 'internal scratch']
  %s0 = inlined_call_operand.hbm [shape: bf16[32,128], index: 0, kind: input, shape index: {}]
  %s1 = inlined_call_operand.hbm [shape: f32[32,128], index: 1, kind: input, shape index: {}]
  %s2 = inlined_call_operand.hbm [shape: bf16[128,128], index: 2, kind: input, shape index: {}]
  %s3 = inlined_call_operand.vmem [shape: f32[1,128], index: 3, kind: input, shape index: {}]
  %s4 = inlined_call_operand.hbm [shape: bf16[128,256], index: 4, kind: input, shape index: {}]
  %s5 = inlined_call_operand.vmem [shape: f32[1,256], index: 5, kind: input, shape index: {}]
  %s6 = inlined_call_operand.hbm [shape: bf16[128,128], index: 6, kind: input, shape index: {}]
  %s7 = inlined_call_operand.vmem [shape: f32[1,128], index: 7, kind: input, shape index: {}]
  %s8 = inlined_call_operand.hbm [shape: f32[32,128], index: 8, kind: output, shape index: {0}]
  %s9 = inlined_call_operand.hbm [shape: f32[32,256], index: 9, kind: output, shape index: {1}]
  %10 = xla_tuple %s8, %s9
  %s11 = sld [smem:[#allocation0]]
  $region93: #{tpu_custom_call.1} parent=0
    _
  %s13 = ssub.s32 1, %s11
  %s14 = scalar_select 0, %s13, %s11
  $region1: #{tpu_custom_call.1} parent=0
    #allocation2 [shape = 'u8[8192]{0}', space=vmem, size = 0x2000, scoped, tag = 'input window, operand 0']
    #allocation3 [shape = 's32[2]{0}', space=sflag, size = 0x8, scoped, tag = 'scoped memory for tpu_custom_call.1']
    #allocation4 [shape = 's32[2]{0}', space=sflag, size = 0x8, scoped, tag = 'scoped memory for tpu_custom_call.1']
    #allocation5 [shape = 'u8[16384]{0}', space=vmem, size = 0x4000, scoped, tag = 'input window, operand 1']
    #allocation6 [shape = 's32[2]{0}', space=sflag, size = 0x8, scoped, tag = 'scoped memory for tpu_custom_call.1']
    #allocation7 [shape = 'u8[32768]{0}', space=vmem, size = 0x8000, scoped, tag = 'input window, operand 2, single buffered']
    #allocation8 [shape = 'u8[65536]{0}', space=vmem, size = 0x10000, scoped, tag = 'input window, operand 4, single buffered']
    #allocation9 [shape = 's32[1]{0}', space=sflag, size = 0x4, scoped, tag = 'scoped memory for tpu_custom_call.1']
    #allocation10 [shape = 'u8[32768]{0}', space=vmem, size = 0x8000, scoped, tag = 'input window, operand 6, single buffered']
    #allocation11 [shape = 'u8[16384]{0}', space=vmem, size = 0x4000, scoped, tag = 'output window, operand 0']
    #allocation12 [shape = 'u8[32768]{0}', space=vmem, size = 0x8000, scoped, tag = 'output window, operand 1']
    #allocation13 [shape = 's32[2]{0}', space=sflag, size = 0x8, scoped, tag = 'scoped memory for tpu_custom_call.1']
    %15 = vsyncpa [#allocation3], 0
    %s16 = scalar_lea.sflag [#allocation3], 1
    %17 = vsyncpa %s16, 0
    %18 = vsyncpa [#allocation6], 0
    %s19 = scalar_lea.sflag [#allocation6], 1
    %20 = vsyncpa %s19, 0
    %21 = vsyncpa [#allocation9], 0
    %22 = vsyncpa [#allocation4], 0
    %s23 = scalar_lea.sflag [#allocation4], 1
    %24 = vsyncpa %s23, 0
    %25 = vsyncpa [#allocation13], 0
    %s26 = scalar_lea.sflag [#allocation13], 1
    %27 = vsyncpa %s26, 0
    loop: start=0, step=1, limit=4
    $region2: #{tpu_custom_call.1} parent=1 // loop_pre_header
      _
    $region3: #{tpu_custom_call.1} parent=1 // loop_header
      %s29 = sphi 0, %s33
      %p30 = scmp.ge.s32.totalorder %s29, 4
      %s39 = sphi 0, %s41
      %s42 = sphi 0, %s39
      %s43 = sphi 0, %s42
      %s59 = sphi 0, %s43
      %s65 = sphi 0, %s67
      %s68 = sphi 0, %s65
      %s69 = sphi 0, %s68
      %s85 = sphi 0, %s69
      %s89 = sphi 0, %s89
      %s91 = sphi 0, %s89
      %s92 = sphi 0, %s91
      %s106 = sphi 0, %s92
      %s110 = sphi 0, %s110
      %s112 = sphi 0, %s110
      %s113 = sphi 0, %s112
      %s127 = sphi 0, %s113
      %s131 = sphi 0, %s131
      %s133 = sphi 0, %s131
      %s134 = sphi 0, %s133
      %s148 = sphi 0, %s134
      %s152 = sphi 0, %s152
      %s154 = sphi 0, %s152
      %s155 = sphi 0, %s154
      %s169 = sphi 0, %s155
      %s173 = sphi 0, %s173
      %s175 = sphi 0, %s173
      %s176 = sphi 0, %s175
      %s190 = sphi 0, %s176
      %s194 = sphi 0, %s194
      %s196 = sphi 0, %s194
      %s197 = sphi 0, %s196
      %s211 = sphi 0, %s197
      %s217 = sphi 0, %s219
      %s220 = sphi 0, %s217
      %s221 = sphi 0, %s220
      %s237 = sphi 0, %s221
      %s243 = sphi 0, %s245
      %s246 = sphi 0, %s243
      %s247 = sphi 0, %s246
      %s263 = sphi 0, %s247
    $region4: #{tpu_custom_call.1} parent=1 // loop_header_branch
      %32 = sbr.rel (%p30) target = $region8
    $region5: #{tpu_custom_call.1} parent=1 // loop_body
      %s34 = ssub.s32 %s29, 1
      %s35 = ssub.s32 %s29, 2
      %s36 = sadd.s32 %s29, 1
      %s37 = ssub.s32 %s29, %s36
      %p38 = scmp.eq.s32.totalorder %s37, 0
      %s40 = sadd.s32 %s39, 1
      %s41 = scalar_select %p38, %s39, %s40
      %p44 = pneg %p38
      %p45 = scmp.eq.s32.totalorder %s29, 1
      %p46 = por %p44, %p45
      %p47 = scmp.ne.s32.totalorder %s39, %s42
      %p48 = scmp.eq.s32.totalorder %s29, 0
      %p49 = por %p47, %p48
      %p50 = scmp.ne.s32.totalorder %s39, %s42
      %p51 = scmp.eq.s32.totalorder %s34, 1
      %p52 = por %p50, %p51
      %p53 = scmp.ne.s32.totalorder %s42, %s43
      %p54 = scmp.eq.s32.totalorder %s34, 0
      %p55 = por %p53, %p54
      %p56 = scmp.ne.s32.totalorder %s42, %s43
      %p57 = scmp.eq.s32.totalorder %s35, 1
      %p58 = por %p56, %p57
      %p60 = scmp.ne.s32.totalorder %s43, %s59
      %p61 = scmp.eq.s32.totalorder %s35, 0
      %p62 = por %p60, %p61
      %s63 = ssub.s32 %s29, %s36
      %p64 = scmp.eq.s32.totalorder %s63, 0
      %s66 = sadd.s32 %s65, 1
      %s67 = scalar_select %p64, %s65, %s66
      %p70 = pneg %p64
      %p71 = scmp.eq.s32.totalorder %s29, 1
      %p72 = por %p70, %p71
      %p73 = scmp.ne.s32.totalorder %s65, %s68
      %p74 = scmp.eq.s32.totalorder %s29, 0
      %p75 = por %p73, %p74
      %p76 = scmp.ne.s32.totalorder %s65, %s68
      %p77 = scmp.eq.s32.totalorder %s34, 1
      %p78 = por %p76, %p77
      %p79 = scmp.ne.s32.totalorder %s68, %s69
      %p80 = scmp.eq.s32.totalorder %s34, 0
      %p81 = por %p79, %p80
      %p82 = scmp.ne.s32.totalorder %s68, %s69
      %p83 = scmp.eq.s32.totalorder %s35, 1
      %p84 = por %p82, %p83
      %p86 = scmp.ne.s32.totalorder %s69, %s85
      %p87 = scmp.eq.s32.totalorder %s35, 0
      %p88 = por %p86, %p87
      %s90 = sadd.s32 %s89, 1
      %p93 = scmp.eq.s32.totalorder %s29, 1
      %p94 = scmp.ne.s32.totalorder %s89, %s91
      %p95 = scmp.eq.s32.totalorder %s29, 0
      %p96 = por %p94, %p95
      %p97 = scmp.ne.s32.totalorder %s89, %s91
      %p98 = scmp.eq.s32.totalorder %s34, 1
      %p99 = por %p97, %p98
      %p100 = scmp.ne.s32.totalorder %s91, %s92
      %p101 = scmp.eq.s32.totalorder %s34, 0
      %p102 = por %p100, %p101
      %p103 = scmp.ne.s32.totalorder %s91, %s92
      %p104 = scmp.eq.s32.totalorder %s35, 1
      %p105 = por %p103, %p104
      %p107 = scmp.ne.s32.totalorder %s92, %s106
      %p108 = scmp.eq.s32.totalorder %s35, 0
      %p109 = por %p107, %p108
      %s111 = sadd.s32 %s110, 1
      %p114 = scmp.eq.s32.totalorder %s29, 1
      %p115 = scmp.ne.s32.totalorder %s110, %s112
      %p116 = scmp.eq.s32.totalorder %s29, 0
      %p117 = por %p115, %p116
      %p118 = scmp.ne.s32.totalorder %s110, %s112
      %p119 = scmp.eq.s32.totalorder %s34, 1
      %p120 = por %p118, %p119
      %p121 = scmp.ne.s32.totalorder %s112, %s113
      %p122 = scmp.eq.s32.totalorder %s34, 0
      %p123 = por %p121, %p122
      %p124 = scmp.ne.s32.totalorder %s112, %s113
      %p125 = scmp.eq.s32.totalorder %s35, 1
      %p126 = por %p124, %p125
      %p128 = scmp.ne.s32.totalorder %s113, %s127
      %p129 = scmp.eq.s32.totalorder %s35, 0
      %p130 = por %p128, %p129
      %s132 = sadd.s32 %s131, 1
      %p135 = scmp.eq.s32.totalorder %s29, 1
      %p136 = scmp.ne.s32.totalorder %s131, %s133
      %p137 = scmp.eq.s32.totalorder %s29, 0
      %p138 = por %p136, %p137
      %p139 = scmp.ne.s32.totalorder %s131, %s133
      %p140 = scmp.eq.s32.totalorder %s34, 1
      %p141 = por %p139, %p140
      %p142 = scmp.ne.s32.totalorder %s133, %s134
      %p143 = scmp.eq.s32.totalorder %s34, 0
      %p144 = por %p142, %p143
      %p145 = scmp.ne.s32.totalorder %s133, %s134
      %p146 = scmp.eq.s32.totalorder %s35, 1
      %p147 = por %p145, %p146
      %p149 = scmp.ne.s32.totalorder %s134, %s148
      %p150 = scmp.eq.s32.totalorder %s35, 0
      %p151 = por %p149, %p150
      %s153 = sadd.s32 %s152, 1
      %p156 = scmp.eq.s32.totalorder %s29, 1
      %p157 = scmp.ne.s32.totalorder %s152, %s154
      %p158 = scmp.eq.s32.totalorder %s29, 0
      %p159 = por %p157, %p158
      %p160 = scmp.ne.s32.totalorder %s152, %s154
      %p161 = scmp.eq.s32.totalorder %s34, 1
      %p162 = por %p160, %p161
      %p163 = scmp.ne.s32.totalorder %s154, %s155
      %p164 = scmp.eq.s32.totalorder %s34, 0
      %p165 = por %p163, %p164
      %p166 = scmp.ne.s32.totalorder %s154, %s155
      %p167 = scmp.eq.s32.totalorder %s35, 1
      %p168 = por %p166, %p167
      %p170 = scmp.ne.s32.totalorder %s155, %s169
      %p171 = scmp.eq.s32.totalorder %s35, 0
      %p172 = por %p170, %p171
      %s174 = sadd.s32 %s173, 1
      %p177 = scmp.eq.s32.totalorder %s29, 1
      %p178 = scmp.ne.s32.totalorder %s173, %s175
      %p179 = scmp.eq.s32.totalorder %s29, 0
      %p180 = por %p178, %p179
      %p181 = scmp.ne.s32.totalorder %s173, %s175
      %p182 = scmp.eq.s32.totalorder %s34, 1
      %p183 = por %p181, %p182
      %p184 = scmp.ne.s32.totalorder %s175, %s176
      %p185 = scmp.eq.s32.totalorder %s34, 0
      %p186 = por %p184, %p185
      %p187 = scmp.ne.s32.totalorder %s175, %s176
      %p188 = scmp.eq.s32.totalorder %s35, 1
      %p189 = por %p187, %p188
      %p191 = scmp.ne.s32.totalorder %s176, %s190
      %p192 = scmp.eq.s32.totalorder %s35, 0
      %p193 = por %p191, %p192
      %s195 = sadd.s32 %s194, 1
      %p198 = scmp.eq.s32.totalorder %s29, 1
      %p199 = scmp.ne.s32.totalorder %s194, %s196
      %p200 = scmp.eq.s32.totalorder %s29, 0
      %p201 = por %p199, %p200
      %p202 = scmp.ne.s32.totalorder %s194, %s196
      %p203 = scmp.eq.s32.totalorder %s34, 1
      %p204 = por %p202, %p203
      %p205 = scmp.ne.s32.totalorder %s196, %s197
      %p206 = scmp.eq.s32.totalorder %s34, 0
      %p207 = por %p205, %p206
      %p208 = scmp.ne.s32.totalorder %s196, %s197
      %p209 = scmp.eq.s32.totalorder %s35, 1
      %p210 = por %p208, %p209
      %p212 = scmp.ne.s32.totalorder %s197, %s211
      %p213 = scmp.eq.s32.totalorder %s35, 0
      %p214 = por %p212, %p213
      %s215 = ssub.s32 %s29, %s36
      %p216 = scmp.eq.s32.totalorder %s215, 0
      %s218 = sadd.s32 %s217, 1
      %s219 = scalar_select %p216, %s217, %s218
      %p222 = pneg %p216
      %p223 = scmp.eq.s32.totalorder %s29, 1
      %p224 = por %p222, %p223
      %p225 = scmp.ne.s32.totalorder %s217, %s220
      %p226 = scmp.eq.s32.totalorder %s29, 0
      %p227 = por %p225, %p226
      %p228 = scmp.ne.s32.totalorder %s217, %s220
      %p229 = scmp.eq.s32.totalorder %s34, 1
      %p230 = por %p228, %p229
      %p231 = scmp.ne.s32.totalorder %s220, %s221
      %p232 = scmp.eq.s32.totalorder %s34, 0
      %p233 = por %p231, %p232
      %p234 = scmp.ne.s32.totalorder %s220, %s221
      %p235 = scmp.eq.s32.totalorder %s35, 1
      %p236 = por %p234, %p235
      %p238 = scmp.ne.s32.totalorder %s221, %s237
      %p239 = scmp.eq.s32.totalorder %s35, 0
      %p240 = por %p238, %p239
      %s241 = ssub.s32 %s29, %s36
      %p242 = scmp.eq.s32.totalorder %s241, 0
      %s244 = sadd.s32 %s243, 1
      %s245 = scalar_select %p242, %s243, %s244
      %p248 = pneg %p242
      %p249 = scmp.eq.s32.totalorder %s29, 1
      %p250 = por %p248, %p249
      %p251 = scmp.ne.s32.totalorder %s243, %s246
      %p252 = scmp.eq.s32.totalorder %s29, 0
      %p253 = por %p251, %p252
      %p254 = scmp.ne.s32.totalorder %s243, %s246
      %p255 = scmp.eq.s32.totalorder %s34, 1
      %p256 = por %p254, %p255
      %p257 = scmp.ne.s32.totalorder %s246, %s247
      %p258 = scmp.eq.s32.totalorder %s34, 0
      %p259 = por %p257, %p258
      %p260 = scmp.ne.s32.totalorder %s246, %s247
      %p261 = scmp.eq.s32.totalorder %s35, 1
      %p262 = por %p260, %p261
      %p264 = scmp.ne.s32.totalorder %s247, %s263
      %p265 = scmp.eq.s32.totalorder %s35, 0
      %p266 = por %p264, %p265
      %p267 = scmp.le.s32.totalorder 1, %s29
      %p268 = scmp.lt.s32.totalorder %s29, 3
      %p269 = pnand %p267, %p268
      %p270 = pneg %p269
      // Predicated region
      $region9: #{tpu_custom_call.1} parent=5 // pred_check
        _
      $region10: #{tpu_custom_call.1} parent=5 // pred_check_branch
        %272 = sbr.rel (%p269) target = $region12
      $region11: #{tpu_custom_call.1} parent=5 // pred_region
        %s273 = ssub.s32 %s29, 1
        // Predicated region
        $region13: #{tpu_custom_call.1} parent=11 // pred_check
          %p274 = pneg %p102
        $region14: #{tpu_custom_call.1} parent=11 // pred_check_branch
          %276 = sbr.rel (%p274) target = $region16
        $region15: #{tpu_custom_call.1} parent=11 // pred_region
          %s278 = ssub.s32 1024, 1024
          %279 = vsyncadd [#allocation6], %s278
          %s280 = sshll.u32 [#allocation7], 4
          %s281 = int_to_ptr.vmem [resolvable:$true] %s280
          %286 = dma.hbm_to_vmem [thread:$0]  %s2, 1024, %s281, [#allocation6], 64, 64, 4
        $region16: #{tpu_custom_call.1} parent=11 // pred_fallthru
          _
        // Predicated region
        $region17: #{tpu_custom_call.1} parent=11 // pred_check
          %p287 = pneg %p123
        $region18: #{tpu_custom_call.1} parent=11 // pred_check_branch
          %289 = sbr.rel (%p287) target = $region20
        $region19: #{tpu_custom_call.1} parent=11 // pred_region
          _
        $region20: #{tpu_custom_call.1} parent=11 // pred_fallthru
          _
        // Predicated region
        $region21: #{tpu_custom_call.1} parent=11 // pred_check
          %p290 = pneg %p144
        $region22: #{tpu_custom_call.1} parent=11 // pred_check_branch
          %292 = sbr.rel (%p290) target = $region24
        $region23: #{tpu_custom_call.1} parent=11 // pred_region
          %s294 = ssub.s32 2048, 2048
          %295 = vsyncadd [#allocation9], %s294
          %s296 = sshll.u32 [#allocation8], 4
          %s297 = int_to_ptr.vmem [resolvable:$true] %s296
          %302 = dma.hbm_to_vmem [thread:$0]  %s4, 2048, %s297, [#allocation9], 128, 128, 8
        $region24: #{tpu_custom_call.1} parent=11 // pred_fallthru
          _
        // Predicated region
        $region25: #{tpu_custom_call.1} parent=11 // pred_check
          %p303 = pneg %p165
        $region26: #{tpu_custom_call.1} parent=11 // pred_check_branch
          %305 = sbr.rel (%p303) target = $region28
        $region27: #{tpu_custom_call.1} parent=11 // pred_region
          _
        $region28: #{tpu_custom_call.1} parent=11 // pred_fallthru
          _
        // Predicated region
        $region29: #{tpu_custom_call.1} parent=11 // pred_check
          %p306 = pneg %p186
        $region30: #{tpu_custom_call.1} parent=11 // pred_check_branch
          %308 = sbr.rel (%p306) target = $region32
        $region31: #{tpu_custom_call.1} parent=11 // pred_region
          %s310 = ssub.s32 1024, 1024
          %311 = vsyncadd [#allocation9], %s310
          %s312 = sshll.u32 [#allocation10], 4
          %s313 = int_to_ptr.vmem [resolvable:$true] %s312
          %318 = dma.hbm_to_vmem [thread:$0]  %s6, 1024, %s313, [#allocation9], 64, 64, 4
        $region32: #{tpu_custom_call.1} parent=11 // pred_fallthru
          _
        // Predicated region
        $region33: #{tpu_custom_call.1} parent=11 // pred_check
          %p319 = pneg %p207
        $region34: #{tpu_custom_call.1} parent=11 // pred_check_branch
          %321 = sbr.rel (%p319) target = $region36
        $region35: #{tpu_custom_call.1} parent=11 // pred_region
          _
        $region36: #{tpu_custom_call.1} parent=11 // pred_fallthru
          _
      $region12: #{tpu_custom_call.1} parent=5 // pred_fallthru
        _
      %p322 = scmp.lt.s32.totalorder %s29, 2
      // Predicated region
      $region37: #{tpu_custom_call.1} parent=5 // pred_check
        %p323 = pneg %p322
      $region38: #{tpu_custom_call.1} parent=5 // pred_check_branch
        %325 = sbr.rel (%p323) target = $region40
      $region39: #{tpu_custom_call.1} parent=5 // pred_region
        // Predicated region
        $region41: #{tpu_custom_call.1} parent=39 // pred_check
          %p326 = pneg %p49
        $region42: #{tpu_custom_call.1} parent=39 // pred_check_branch
          %328 = sbr.rel (%p326) target = $region44
        $region43: #{tpu_custom_call.1} parent=39 // pred_region
          %s329 = sand.u32 %s39, 1
          %s330 = scalar_lea.sflag [#allocation3], %s329
          %s331 = sand.u32 %s39, 1
          %s332 = smul.addr %s331, 8
          %s333 = scalar_lea.vmem [#allocation2], %s332
          %s334 = smul.u32 2, %s29
          %s336 = ssub.s32 128, 128
          %337 = vsyncadd %s330, %s336
          %s338 = smul.addr %s334, 64
          %s339 = scalar_lea.hbm %s0, %s338
          %s340 = sshll.u32 %s333, 4
          %s341 = int_to_ptr.vmem [resolvable:$true] %s340
          %346 = dma.hbm_to_vmem [thread:$0]  %s339, 128, %s341, %s330, 64, 64, 4
        $region44: #{tpu_custom_call.1} parent=39 // pred_fallthru
          _
        // Predicated region
        $region45: #{tpu_custom_call.1} parent=39 // pred_check
          %p347 = pneg %p75
        $region46: #{tpu_custom_call.1} parent=39 // pred_check_branch
          %349 = sbr.rel (%p347) target = $region48
        $region47: #{tpu_custom_call.1} parent=39 // pred_region
          %s350 = sand.u32 %s29, 1
          %s351 = scalar_lea.sflag [#allocation6], %s350
          %s352 = sand.u32 %s65, 1
          %s353 = smul.addr %s352, 16
          %s354 = scalar_lea.vmem [#allocation5], %s353
          %s355 = smul.u32 2, %s29
          %s357 = ssub.s32 256, 256
          %358 = vsyncadd %s351, %s357
          %s359 = smul.addr %s355, 128
          %s360 = scalar_lea.hbm %s1, %s359
          %s361 = sshll.u32 %s354, 4
          %s362 = int_to_ptr.vmem [resolvable:$true] %s361
          %367 = dma.hbm_to_vmem [thread:$0]  %s360, 256, %s362, %s351, 128, 128, 8
        $region48: #{tpu_custom_call.1} parent=39 // pred_fallthru
          _
      $region40: #{tpu_custom_call.1} parent=5 // pred_fallthru
        _
      %p368 = scmp.le.s32.totalorder 1, %s29
      %p369 = scmp.lt.s32.totalorder %s29, 3
      %p370 = pnand %p368, %p369
      %p371 = pneg %p370
      // Predicated region
      $region49: #{tpu_custom_call.1} parent=5 // pred_check
        _
      $region50: #{tpu_custom_call.1} parent=5 // pred_check_branch
        %373 = sbr.rel (%p370) target = $region52
      $region51: #{tpu_custom_call.1} parent=5 // pred_region
        %s374 = ssub.s32 %s29, 1
        %s375 = sand.u32 %s42, 1
        %s376 = scalar_lea.sflag [#allocation3], %s375
        %s377 = sand.u32 %s42, 1
        %s378 = smul.addr %s377, 8
        %s379 = scalar_lea.vmem [#allocation2], %s378
        // Predicated region
        $region53: #{tpu_custom_call.1} parent=51 // pred_check
          %p380 = pneg %p55
        $region54: #{tpu_custom_call.1} parent=51 // pred_check_branch
          %382 = sbr.rel (%p380) target = $region56
        $region55: #{tpu_custom_call.1} parent=51 // pred_region
          %383 = dma.done %s376, 128
        $region56: #{tpu_custom_call.1} parent=51 // pred_fallthru
          _
        %s384 = sand.u32 %s34, 1
        %s385 = scalar_lea.sflag [#allocation6], %s384
        %s386 = sand.u32 %s68, 1
        %s387 = smul.addr %s386, 16
        %s388 = scalar_lea.vmem [#allocation5], %s387
        // Predicated region
        $region57: #{tpu_custom_call.1} parent=51 // pred_check
          %p389 = pneg %p81
        $region58: #{tpu_custom_call.1} parent=51 // pred_check_branch
          %391 = sbr.rel (%p389) target = $region60
        $region59: #{tpu_custom_call.1} parent=51 // pred_region
          %392 = dma.done %s385, 256
        $region60: #{tpu_custom_call.1} parent=51 // pred_fallthru
          _
        // Predicated region
        $region61: #{tpu_custom_call.1} parent=51 // pred_check
          %p393 = pneg %p102
        $region62: #{tpu_custom_call.1} parent=51 // pred_check_branch
          %395 = sbr.rel (%p393) target = $region64
        $region63: #{tpu_custom_call.1} parent=51 // pred_region
          %396 = dma.done [#allocation6], 1024
        $region64: #{tpu_custom_call.1} parent=51 // pred_fallthru
          _
        // Predicated region
        $region65: #{tpu_custom_call.1} parent=51 // pred_check
          %p397 = pneg %p144
        $region66: #{tpu_custom_call.1} parent=51 // pred_check_branch
          %399 = sbr.rel (%p397) target = $region68
        $region67: #{tpu_custom_call.1} parent=51 // pred_region
          %400 = dma.done [#allocation9], 2048
        $region68: #{tpu_custom_call.1} parent=51 // pred_fallthru
          _
        // Predicated region
        $region69: #{tpu_custom_call.1} parent=51 // pred_check
          %p401 = pneg %p186
        $region70: #{tpu_custom_call.1} parent=51 // pred_check_branch
          %403 = sbr.rel (%p401) target = $region72
        $region71: #{tpu_custom_call.1} parent=51 // pred_region
          %404 = dma.done [#allocation9], 1024
        $region72: #{tpu_custom_call.1} parent=51 // pred_fallthru
          _
        %s405 = sand.u32 %s42, 1
        %s406 = scalar_lea.sflag [#allocation3], %s405
        %s407 = sand.u32 %s42, 1
        %s408 = smul.addr %s407, 8
        %s409 = scalar_lea.vmem [#allocation2], %s408
        %p410 = pneg %p55
        %p411 = pneg %p52
        %s412 = sand.u32 %s34, 1
        %s413 = scalar_lea.sflag [#allocation6], %s412
        %s414 = sand.u32 %s68, 1
        %s415 = smul.addr %s414, 16
        %s416 = scalar_lea.vmem [#allocation5], %s415
        %p417 = pneg %p81
        %p418 = pneg %p78
        %p419 = pneg %p102
        %p420 = pneg %p99
        %p421 = pneg %p123
        %p422 = pneg %p120
        %p423 = pneg %p144
        %p424 = pneg %p141
        %p425 = pneg %p165
        %p426 = pneg %p162
        %p427 = pneg %p186
        %p428 = pneg %p183
        %p429 = pneg %p207
        %p430 = pneg %p204
        %p431 = pneg %p233
        %p432 = pneg %p230
        %s433 = sand.u32 %s220, 1
        %s434 = scalar_lea.sflag [#allocation4], %s433
        %s435 = sand.u32 %s220, 1
        %s436 = smul.addr %s435, 16
        %s437 = scalar_lea.vmem [#allocation11], %s436
        %p438 = pneg %p259
        %p439 = pneg %p256
        %s440 = sand.u32 %s246, 1
        %s441 = scalar_lea.sflag [#allocation13], %s440
        %s442 = sand.u32 %s246, 1
        %s443 = smul.addr %s442, 32
        %s444 = scalar_lea.vmem [#allocation12], %s443
        %s445 = smul.u32 2, %s34
        %s446 = smul.u32 2, %s34
        %s447 = smul.u32 2, %s34
        %s448 = smul.u32 2, %s34
        %v450 = vld [vmem:[%s379] sm:$0xf]
        %v451 = vld [vmem:[%s379 + $0x4] sm:$0xf]
        %v452 = vld [vmem:[#allocation7] sm:$0xf]
        %v453 = vld [vmem:[#allocation7 + $0x4] sm:$0xf]
        %v454 = vld [vmem:[#allocation7 + $0x8] sm:$0xf]
        %v455 = vld [vmem:[#allocation7 + $0xc] sm:$0xf]
        %v456 = vld [vmem:[#allocation7 + $0x10] sm:$0xf]
        %v457 = vld [vmem:[#allocation7 + $0x14] sm:$0xf]
        %v458 = vld [vmem:[#allocation7 + $0x18] sm:$0xf]
        %v459 = vld [vmem:[#allocation7 + $0x1c] sm:$0xf]
        %v460 = vld [vmem:[#allocation7 + $0x20] sm:$0xf]
        %v461 = vld [vmem:[#allocation7 + $0x24] sm:$0xf]
        %v462 = vld [vmem:[#allocation7 + $0x28] sm:$0xf]
        %v463 = vld [vmem:[#allocation7 + $0x2c] sm:$0xf]
        %v464 = vld [vmem:[#allocation7 + $0x30] sm:$0xf]
        %v465 = vld [vmem:[#allocation7 + $0x34] sm:$0xf]
        %v466 = vld [vmem:[#allocation7 + $0x38] sm:$0xf]
        %v467 = vld [vmem:[#allocation7 + $0x3c] sm:$0xf]
        %v468 = vld [vmem:[%s3] sm:$0x1]
        %v470 = vlaneseq
        %v471 = vshrl.u32 %v470, 7
        %v472 = vsub.s32 0, %v471
        %v473 = vrot.slane %v468, %v472
        %v477 = vunpack.c.l.b16 %v450
        %v478 = vunpack.c.l.b16 %v451
        %v479 = vpack.c.b16 %v478, %v477
        %v497 = vunpack.c.l.b16 %v452
        %v498 = vunpack.c.l.b16 %v453
        %v499 = vunpack.c.l.b16 %v454
        %v500 = vunpack.c.l.b16 %v455
        %v501 = vunpack.c.l.b16 %v456
        %v502 = vunpack.c.l.b16 %v457
        %v503 = vunpack.c.l.b16 %v458
        %v504 = vunpack.c.l.b16 %v459
        %v505 = vunpack.c.l.b16 %v460
        %v506 = vunpack.c.l.b16 %v461
        %v507 = vunpack.c.l.b16 %v462
        %v508 = vunpack.c.l.b16 %v463
        %v509 = vunpack.c.l.b16 %v464
        %v510 = vunpack.c.l.b16 %v465
        %v511 = vunpack.c.l.b16 %v466
        %v512 = vunpack.c.l.b16 %v467
        %v513 = vpack.c.b16 %v498, %v497
        %v514 = vpack.c.b16 %v500, %v499
        %v515 = vpack.c.b16 %v502, %v501
        %v516 = vpack.c.b16 %v504, %v503
        %v517 = vpack.c.b16 %v506, %v505
        %v518 = vpack.c.b16 %v508, %v507
        %v519 = vpack.c.b16 %v510, %v509
        %v520 = vpack.c.b16 %v512, %v511
        %529 = vmatprep.subr.bf16.mxu0 0
        %530 = vmatpush1.bf16.msra.mxu0 %v513
        %531 = vmatprep.subr.bf16.mxu0 0
        %532 = vmatpush1.bf16.msra.mxu0 %v514
        %533 = vmatprep.subr.bf16.mxu0 0
        %534 = vmatpush1.bf16.msra.mxu0 %v515
        %535 = vmatprep.subr.bf16.mxu0 0
        %536 = vmatpush1.bf16.msra.mxu0 %v516
        %537 = vmatprep.subr.bf16.mxu0 0
        %538 = vmatpush1.bf16.msra.mxu0 %v517
        %539 = vmatprep.subr.bf16.mxu0 0
        %540 = vmatpush1.bf16.msra.mxu0 %v518
        %541 = vmatprep.subr.bf16.mxu0 0
        %542 = vmatpush1.bf16.msra.mxu0 %v519
        %543 = vmatprep.subr.bf16.mxu0 0
        %544 = vmatpush1.bf16.msra.mxu0 %v520
        %545 = vmatprep.subr.bf16.mxu0 0
        %546 = vmatpush1.bf16.msra.mxu0 0
        %547 = vmatprep.subr.bf16.mxu0 0
        %548 = vmatpush1.bf16.msra.mxu0 0
        %549 = vmatprep.subr.bf16.mxu0 0
        %550 = vmatpush1.bf16.msra.mxu0 0
        %551 = vmatprep.subr.bf16.mxu0 0
        %552 = vmatpush1.bf16.msra.mxu0 0
        %553 = vmatprep.subr.bf16.mxu0 0
        %554 = vmatpush1.bf16.msra.mxu0 0
        %555 = vmatprep.subr.bf16.mxu0 0
        %556 = vmatpush1.bf16.msra.mxu0 0
        %557 = vmatprep.subr.bf16.mxu0 0
        %558 = vmatpush1.bf16.msra.mxu0 0
        %559 = vmatprep.subr.bf16.mxu0 0
        %560 = vmatpush1.bf16.msra.mxu0 0
        %561 = vmatprep.mubr.bf16.mxu0 0
        %562 = vmatmul.mubr.bf16.gmra.mrb[0].mxu0 %v479
        %v563 = vpop.f32.mrb[0].mxu0
        %v564 = vadd.f32 %v473, %v563
        %v565 = vpop.f32.mrb[0].mxu0
        %v566 = vpop.f32.mrb[0].mxu0
        %v567 = vadd.f32 %v473, %v566
        %v568 = vpop.f32.mrb[0].mxu0
        %569 = vdwg.mxu0
        %v570 = vmax.f32 %v564, 0.0
        %v571 = vmax.f32 %v567, 0.0
        %v572 = vpack.c.bf16 %v571, %v570
        %v573 = vld [vmem:[#allocation8] sm:$0xff]
        %v574 = vld [vmem:[#allocation8 + $0x8] sm:$0xff]
        %v575 = vld [vmem:[#allocation8 + $0x10] sm:$0xff]
        %v576 = vld [vmem:[#allocation8 + $0x18] sm:$0xff]
        %v577 = vld [vmem:[#allocation8 + $0x20] sm:$0xff]
        %v578 = vld [vmem:[#allocation8 + $0x28] sm:$0xff]
        %v579 = vld [vmem:[#allocation8 + $0x30] sm:$0xff]
        %v580 = vld [vmem:[#allocation8 + $0x38] sm:$0xff]
        %v581 = vld [vmem:[#allocation8 + $0x40] sm:$0xff]
        %v582 = vld [vmem:[#allocation8 + $0x48] sm:$0xff]
        %v583 = vld [vmem:[#allocation8 + $0x50] sm:$0xff]
        %v584 = vld [vmem:[#allocation8 + $0x58] sm:$0xff]
        %v585 = vld [vmem:[#allocation8 + $0x60] sm:$0xff]
        %v586 = vld [vmem:[#allocation8 + $0x68] sm:$0xff]
        %v587 = vld [vmem:[#allocation8 + $0x70] sm:$0xff]
        %v588 = vld [vmem:[#allocation8 + $0x78] sm:$0xff]
        %v589 = vld [vmem:[%s5] sm:$0x3]
        %v591 = vlaneseq
        %v592 = vshrl.u32 %v591, 7
        %v593 = vsub.s32 0, %v592
        %v594 = vrot.slane %v589, %v593
        %v595 = vlaneseq
        %v596 = vshrl.u32 %v595, 7
        %v597 = vsub.s32 1, %v596
        %v598 = vrot.slane %v589, %v597
        %v617 = vunpack.c.l.b16 %v573
        %v618 = vunpack.c.h.b16 %v573
        %v619 = vunpack.c.l.b16 %v574
        %v620 = vunpack.c.h.b16 %v574
        %v621 = vunpack.c.l.b16 %v575
        %v622 = vunpack.c.h.b16 %v575
        %v623 = vunpack.c.l.b16 %v576
        %v624 = vunpack.c.h.b16 %v576
        %v625 = vunpack.c.l.b16 %v577
        %v626 = vunpack.c.h.b16 %v577
        %v627 = vunpack.c.l.b16 %v578
        %v628 = vunpack.c.h.b16 %v578
        %v629 = vunpack.c.l.b16 %v579
        %v630 = vunpack.c.h.b16 %v579
        %v631 = vunpack.c.l.b16 %v580
        %v632 = vunpack.c.h.b16 %v580
        %v633 = vunpack.c.l.b16 %v581
        %v634 = vunpack.c.h.b16 %v581
        %v635 = vunpack.c.l.b16 %v582
        %v636 = vunpack.c.h.b16 %v582
        %v637 = vunpack.c.l.b16 %v583
        %v638 = vunpack.c.h.b16 %v583
        %v639 = vunpack.c.l.b16 %v584
        %v640 = vunpack.c.h.b16 %v584
        %v641 = vunpack.c.l.b16 %v585
        %v642 = vunpack.c.h.b16 %v585
        %v643 = vunpack.c.l.b16 %v586
        %v644 = vunpack.c.h.b16 %v586
        %v645 = vunpack.c.l.b16 %v587
        %v646 = vunpack.c.h.b16 %v587
        %v647 = vunpack.c.l.b16 %v588
        %v648 = vunpack.c.h.b16 %v588
        %v649 = vpack.c.b16 %v619, %v617
        %v650 = vpack.c.b16 %v620, %v618
        %v651 = vpack.c.b16 %v623, %v621
        %v652 = vpack.c.b16 %v624, %v622
        %v653 = vpack.c.b16 %v627, %v625
        %v654 = vpack.c.b16 %v628, %v626
        %v655 = vpack.c.b16 %v631, %v629
        %v656 = vpack.c.b16 %v632, %v630
        %v657 = vpack.c.b16 %v635, %v633
        %v658 = vpack.c.b16 %v636, %v634
        %v659 = vpack.c.b16 %v639, %v637
        %v660 = vpack.c.b16 %v640, %v638
        %v661 = vpack.c.b16 %v643, %v641
        %v662 = vpack.c.b16 %v644, %v642
        %v663 = vpack.c.b16 %v647, %v645
        %v664 = vpack.c.b16 %v648, %v646
        %681 = vmatprep.subr.bf16.mxu0 %v650
        %682 = vmatpush1.bf16.msra.mxu0 %v649
        %683 = vmatprep.subr.bf16.mxu0 %v652
        %684 = vmatpush1.bf16.msra.mxu0 %v651
        %685 = vmatprep.subr.bf16.mxu0 %v654
        %686 = vmatpush1.bf16.msra.mxu0 %v653
        %687 = vmatprep.subr.bf16.mxu0 %v656
        %688 = vmatpush1.bf16.msra.mxu0 %v655
        %689 = vmatprep.subr.bf16.mxu0 %v658
        %690 = vmatpush1.bf16.msra.mxu0 %v657
        %691 = vmatprep.subr.bf16.mxu0 %v660
        %692 = vmatpush1.bf16.msra.mxu0 %v659
        %693 = vmatprep.subr.bf16.mxu0 %v662
        %694 = vmatpush1.bf16.msra.mxu0 %v661
        %695 = vmatprep.subr.bf16.mxu0 %v664
        %696 = vmatpush1.bf16.msra.mxu0 %v663
        %697 = vmatprep.subr.bf16.mxu0 0
        %698 = vmatpush1.bf16.msra.mxu0 0
        %699 = vmatprep.subr.bf16.mxu0 0
        %700 = vmatpush1.bf16.msra.mxu0 0
        %701 = vmatprep.subr.bf16.mxu0 0
        %702 = vmatpush1.bf16.msra.mxu0 0
        %703 = vmatprep.subr.bf16.mxu0 0
        %704 = vmatpush1.bf16.msra.mxu0 0
        %705 = vmatprep.subr.bf16.mxu0 0
        %706 = vmatpush1.bf16.msra.mxu0 0
        %707 = vmatprep.subr.bf16.mxu0 0
        %708 = vmatpush1.bf16.msra.mxu0 0
        %709 = vmatprep.subr.bf16.mxu0 0
        %710 = vmatpush1.bf16.msra.mxu0 0
        %711 = vmatprep.subr.bf16.mxu0 0
        %712 = vmatpush1.bf16.msra.mxu0 0
        %713 = vmatprep.mubr.bf16.mxu0 0
        %714 = vmatmul.mubr.bf16.gmra.mrb[0].mxu0 %v572
        %v715 = vpop.f32.mrb[0].mxu0
        %v716 = vadd.f32 %v594, %v715
        %v717 = vpop.f32.mrb[0].mxu0
        %v718 = vadd.f32 %v598, %v717
        %v719 = vpop.f32.mrb[0].mxu0
        %v720 = vadd.f32 %v594, %v719
        %v721 = vpop.f32.mrb[0].mxu0
        %v722 = vadd.f32 %v598, %v721
        %723 = vdwg.mxu0
        %v724 = vmul.f32 %v718, 0.5
        %v725 = vmul.f32 %v722, 0.5
        %v726 = vmul.f32 %v724, 1.442695
        %v727 = vpow.pop %v726
        %v728 = vmul.f32 %v725, 1.442695
        %v729 = vpow.pop %v728
        %v730 = vld [vmem:[%s388] sm:$0xff]
        %v731 = vld [vmem:[%s388 + $0x8] sm:$0xff]
        %v732 = vmul.f32 %v727, %v730
        %v733 = vmul.f32 %v729, %v731
        %v734 = vadd.f32 %v716, %v732
        %v735 = vadd.f32 %v720, %v733
        %v736 = vpack.c.bf16 %v735, %v734
        %v737 = vld [vmem:[#allocation10] sm:$0xf]
        %v738 = vld [vmem:[#allocation10 + $0x4] sm:$0xf]
        %v739 = vld [vmem:[#allocation10 + $0x8] sm:$0xf]
        %v740 = vld [vmem:[#allocation10 + $0xc] sm:$0xf]
        %v741 = vld [vmem:[#allocation10 + $0x10] sm:$0xf]
        %v742 = vld [vmem:[#allocation10 + $0x14] sm:$0xf]
        %v743 = vld [vmem:[#allocation10 + $0x18] sm:$0xf]
        %v744 = vld [vmem:[#allocation10 + $0x1c] sm:$0xf]
        %v745 = vld [vmem:[#allocation10 + $0x20] sm:$0xf]
        %v746 = vld [vmem:[#allocation10 + $0x24] sm:$0xf]
        %v747 = vld [vmem:[#allocation10 + $0x28] sm:$0xf]
        %v748 = vld [vmem:[#allocation10 + $0x2c] sm:$0xf]
        %v749 = vld [vmem:[#allocation10 + $0x30] sm:$0xf]
        %v750 = vld [vmem:[#allocation10 + $0x34] sm:$0xf]
        %v751 = vld [vmem:[#allocation10 + $0x38] sm:$0xf]
        %v752 = vld [vmem:[#allocation10 + $0x3c] sm:$0xf]
        %v753 = vld [vmem:[%s7] sm:$0x1]
        %v755 = vlaneseq
        %v756 = vshrl.u32 %v755, 7
        %v757 = vsub.s32 0, %v756
        %v758 = vrot.slane %v753, %v757
        %v776 = vunpack.c.l.b16 %v737
        %v777 = vunpack.c.l.b16 %v738
        %v778 = vunpack.c.l.b16 %v739
        %v779 = vunpack.c.l.b16 %v740
        %v780 = vunpack.c.l.b16 %v741
        %v781 = vunpack.c.l.b16 %v742
        %v782 = vunpack.c.l.b16 %v743
        %v783 = vunpack.c.l.b16 %v744
        %v784 = vunpack.c.l.b16 %v745
        %v785 = vunpack.c.l.b16 %v746
        %v786 = vunpack.c.l.b16 %v747
        %v787 = vunpack.c.l.b16 %v748
        %v788 = vunpack.c.l.b16 %v749
        %v789 = vunpack.c.l.b16 %v750
        %v790 = vunpack.c.l.b16 %v751
        %v791 = vunpack.c.l.b16 %v752
        %v792 = vpack.c.b16 %v777, %v776
        %v793 = vpack.c.b16 %v779, %v778
        %v794 = vpack.c.b16 %v781, %v780
        %v795 = vpack.c.b16 %v783, %v782
        %v796 = vpack.c.b16 %v785, %v784
        %v797 = vpack.c.b16 %v787, %v786
        %v798 = vpack.c.b16 %v789, %v788
        %v799 = vpack.c.b16 %v791, %v790
        %808 = vmatprep.subr.bf16.mxu0 0
        %809 = vmatpush1.bf16.msra.mxu0 %v792
        %810 = vmatprep.subr.bf16.mxu0 0
        %811 = vmatpush1.bf16.msra.mxu0 %v793
        %812 = vmatprep.subr.bf16.mxu0 0
        %813 = vmatpush1.bf16.msra.mxu0 %v794
        %814 = vmatprep.subr.bf16.mxu0 0
        %815 = vmatpush1.bf16.msra.mxu0 %v795
        %816 = vmatprep.subr.bf16.mxu0 0
        %817 = vmatpush1.bf16.msra.mxu0 %v796
        %818 = vmatprep.subr.bf16.mxu0 0
        %819 = vmatpush1.bf16.msra.mxu0 %v797
        %820 = vmatprep.subr.bf16.mxu0 0
        %821 = vmatpush1.bf16.msra.mxu0 %v798
        %822 = vmatprep.subr.bf16.mxu0 0
        %823 = vmatpush1.bf16.msra.mxu0 %v799
        %824 = vmatprep.subr.bf16.mxu0 0
        %825 = vmatpush1.bf16.msra.mxu0 0
        %826 = vmatprep.subr.bf16.mxu0 0
        %827 = vmatpush1.bf16.msra.mxu0 0
        %828 = vmatprep.subr.bf16.mxu0 0
        %829 = vmatpush1.bf16.msra.mxu0 0
        %830 = vmatprep.subr.bf16.mxu0 0
        %831 = vmatpush1.bf16.msra.mxu0 0
        %832 = vmatprep.subr.bf16.mxu0 0
        %833 = vmatpush1.bf16.msra.mxu0 0
        %834 = vmatprep.subr.bf16.mxu0 0
        %835 = vmatpush1.bf16.msra.mxu0 0
        %836 = vmatprep.subr.bf16.mxu0 0
        %837 = vmatpush1.bf16.msra.mxu0 0
        %838 = vmatprep.subr.bf16.mxu0 0
        %839 = vmatpush1.bf16.msra.mxu0 0
        %840 = vmatprep.mubr.bf16.mxu0 0
        %841 = vmatmul.mubr.bf16.gmra.mrb[0].mxu0 %v736
        %v842 = vpop.f32.mrb[0].mxu0
        %v843 = vadd.f32 %v758, %v842
        %v844 = vpop.f32.mrb[0].mxu0
        %v845 = vpop.f32.mrb[0].mxu0
        %v846 = vadd.f32 %v758, %v845
        %v847 = vpop.f32.mrb[0].mxu0
        %848 = vdwg.mxu0
        %v849 = vxor.u32 %v843, 2147483648
        %v850 = vxor.u32 %v846, 2147483648
        %v851 = vmul.f32 %v849, 1.442695
        %v852 = vpow.pop %v851
        %v853 = vmul.f32 %v850, 1.442695
        %v854 = vpow.pop %v853
        %v855 = vadd.f32 %v852, 1.0
        %v856 = vadd.f32 %v854, 1.0
        %v857 = vrcp.pop %v855
        %v858 = vmul.f32 1.0, %v857
        %v859 = vrcp.pop %v856
        %v860 = vmul.f32 1.0, %v859
        %861 = vst [vmem:[%s437] sm:$0xff] %v858
        %862 = vst [vmem:[%s437 + $0x8] sm:$0xff] %v860
        %863 = vst [vmem:[%s444] sm:$0xff] %v716
        %864 = vst [vmem:[%s444 + $0x8] sm:$0xff] %v718
        %865 = vst [vmem:[%s444 + $0x10] sm:$0xff] %v720
        %866 = vst [vmem:[%s444 + $0x18] sm:$0xff] %v722
        %s867 = sand.u32 %s220, 1
        %s868 = scalar_lea.sflag [#allocation4], %s867
        %s869 = sand.u32 %s220, 1
        %s870 = smul.addr %s869, 16
        %s871 = scalar_lea.vmem [#allocation11], %s870
        %s872 = sand.u32 %s246, 1
        %s873 = scalar_lea.sflag [#allocation13], %s872
        %s874 = sand.u32 %s246, 1
        %s875 = smul.addr %s874, 32
        %s876 = scalar_lea.vmem [#allocation12], %s875
        // Predicated region
        $region73: #{tpu_custom_call.1} parent=51 // pred_check
          %p877 = pneg %p230
        $region74: #{tpu_custom_call.1} parent=51 // pred_check_branch
          %879 = sbr.rel (%p877) target = $region76
        $region75: #{tpu_custom_call.1} parent=51 // pred_region
          %s880 = smul.u32 2, %s34
          %s882 = ssub.s32 256, 256
          %883 = vsyncadd %s868, %s882
          %s884 = smul.addr %s880, 128
          %s885 = scalar_lea.hbm %s8, %s884
          %s886 = sshll.u32 %s871, 4
          %s887 = int_to_ptr.vmem [resolvable:$true] %s886
          %892 = dma.vmem_to_hbm [thread:$0]  %s887, 256, %s885, %s868, 128, 128, 8
        $region76: #{tpu_custom_call.1} parent=51 // pred_fallthru
          _
        // Predicated region
        $region77: #{tpu_custom_call.1} parent=51 // pred_check
          %p893 = pneg %p256
        $region78: #{tpu_custom_call.1} parent=51 // pred_check_branch
          %895 = sbr.rel (%p893) target = $region80
        $region79: #{tpu_custom_call.1} parent=51 // pred_region
          %s896 = smul.u32 2, %s34
          %s898 = ssub.s32 512, 512
          %899 = vsyncadd %s873, %s898
          %s900 = smul.addr %s896, 2
          %s901 = smul.addr %s900, 128
          %s902 = scalar_lea.hbm %s9, %s901
          %s903 = sshll.u32 %s876, 4
          %s904 = int_to_ptr.vmem [resolvable:$true] %s903
          %909 = dma.vmem_to_hbm [thread:$0]  %s904, 512, %s902, %s873, 256, 256, 16
        $region80: #{tpu_custom_call.1} parent=51 // pred_fallthru
          _
      $region52: #{tpu_custom_call.1} parent=5 // pred_fallthru
        _
      %p910 = scmp.le.s32.totalorder 2, %s29
      // Predicated region
      $region81: #{tpu_custom_call.1} parent=5 // pred_check
        %p911 = pneg %p910
      $region82: #{tpu_custom_call.1} parent=5 // pred_check_branch
        %913 = sbr.rel (%p911) target = $region84
      $region83: #{tpu_custom_call.1} parent=5 // pred_region
        %s914 = ssub.s32 %s29, 2
        // Predicated region
        $region85: #{tpu_custom_call.1} parent=83 // pred_check
          %p915 = pneg %p236
        $region86: #{tpu_custom_call.1} parent=83 // pred_check_branch
          %917 = sbr.rel (%p915) target = $region88
        $region87: #{tpu_custom_call.1} parent=83 // pred_region
          %s918 = sand.u32 %s221, 1
          %s919 = scalar_lea.sflag [#allocation4], %s918
          %s920 = sand.u32 %s221, 1
          %s921 = smul.addr %s920, 16
          %s922 = scalar_lea.vmem [#allocation11], %s921
          %923 = dma.done %s919, 256
        $region88: #{tpu_custom_call.1} parent=83 // pred_fallthru
          _
        // Predicated region
        $region89: #{tpu_custom_call.1} parent=83 // pred_check
          %p924 = pneg %p262
        $region90: #{tpu_custom_call.1} parent=83 // pred_check_branch
          %926 = sbr.rel (%p924) target = $region92
        $region91: #{tpu_custom_call.1} parent=83 // pred_region
          %s927 = sand.u32 %s247, 1
          %s928 = scalar_lea.sflag [#allocation13], %s927
          %s929 = sand.u32 %s247, 1
          %s930 = smul.addr %s929, 32
          %s931 = scalar_lea.vmem [#allocation12], %s930
          %932 = dma.done %s928, 512
        $region92: #{tpu_custom_call.1} parent=83 // pred_fallthru
          _
      $region84: #{tpu_custom_call.1} parent=5 // pred_fallthru
        _
    $region6: #{tpu_custom_call.1} parent=1 // loop_footer
      %s33 = sadd.s32 1, %s29
    $region7: #{tpu_custom_call.1} parent=1 // loop_footer_branch
      %28 = sbr.rel target = $region3
    $region8: #{tpu_custom_call.1} parent=1 // loop_exit
      _
    %933 = vsyncpa [#allocation3], 1
    %s934 = scalar_lea.sflag [#allocation3], 1
    %935 = vsyncpa %s934, 1
    %936 = vsyncpa [#allocation6], 1
    %s937 = scalar_lea.sflag [#allocation6], 1
    %938 = vsyncpa %s937, 1
    %939 = vsyncpa [#allocation9], 1
    %940 = vsyncpa [#allocation4], 1
    %s941 = scalar_lea.sflag [#allocation4], 1
    %942 = vsyncpa %s941, 1
    %943 = vsyncpa [#allocation13], 1
    %s944 = scalar_lea.sflag [#allocation13], 1
    %945 = vsyncpa %s944, 1

</llo_original>
